<compile_context>
chip_gen: v7x
topology: tpu7x:2x2x1
jax: 0.10.0
libtpu: 0.0.40
codegen_flags: <defaults>
</compile_context>

<pallas_src>
import functools

import jax
import jax.numpy as jnp
from jax.experimental import pallas as pl
from jax.experimental.pallas import tpu as pltpu  # noqa: F401  (TPU backend hooks)

NEG_SLOPE = 0.01   # torch.nn.LeakyReLU default negative_slope
BN_EPS = 1e-5      # torch.nn.BatchNorm1d default eps


def mlp_kernel(x_ref, w_ref, v_ref, o_ref):
    """x_ref: (B, P) f32 (feature-padded input)
       w_ref: (n_hidden, P, P) f32 padded hidden weights (stored (in, out))
       v_ref: (n_hidden + 1, 4, P) f32 vectors:
              hidden i -> rows [bias, gamma, beta, 0]
              entry n_hidden -> rows [w_out_row, b_out (broadcast), 0, 0]
       o_ref: (B, 1) f32
    """
    h = x_ref[...]                       # (B, P) fp32
    n_hidden = w_ref.shape[0]

    for i in range(n_hidden):            # static unroll: full LLO visibility
        W = w_ref[i].astype(jnp.bfloat16)        # (P, P)
        vec = v_ref[i]                           # (4, P)
        b = vec[0:1, :]
        gamma = vec[1:2, :]
        beta = vec[2:3, :]

        # Linear: single bf16 MXU pass, fp32 accumulate.
        h = jnp.dot(h.astype(jnp.bfloat16), W,
                    preferred_element_type=jnp.float32) + b
        # LeakyReLU
        h = jnp.where(h >= 0, h, NEG_SLOPE * h)
        # BatchNorm1d (training mode, biased variance) with fused scale/shift.
        # Two independent sublane reductions (mean, E[h^2]).
        mean = jnp.mean(h, axis=0, keepdims=True)
        msq = jnp.mean(h * h, axis=0, keepdims=True)
        var = jnp.maximum(msq - mean * mean, 0.0)
        scale = gamma * jax.lax.rsqrt(var + BN_EPS)   # (1, P) row math, EUP rsqrt
        shift = beta - mean * scale
        h = h * scale + shift
        # Dropout(p=0.0) -> identity

    # Output Linear (P -> 1) as VPU mul + lane reduce (skips an MXU round-trip).
    vout = v_ref[n_hidden]               # (4, P)
    w_out = vout[0:1, :]                 # (1, P) transposed output weight (padded)
    b_out = vout[1:2, 0:1]               # (1, 1)
    o_ref[...] = jnp.sum(h * w_out, axis=-1, keepdims=True) + b_out


def init_params(key, dim_input, dim_hidden):
    """Deterministic init mimicking torch defaults (Linear: U(-1/sqrt(fan_in), ...))."""
    h, h2 = dim_hidden, dim_hidden // 2
    layer_dims = ([(dim_input, h)] + [(h, h)] * 4 +
                  [(h, h2)] + [(h2, h2)] * 9)          # 15 hidden layers
    out_dims = (h2, 1)

    hidden = []
    for (fan_in, fan_out) in layer_dims:
        key, kw, kb = jax.random.split(key, 3)
        bound = 1.0 / jnp.sqrt(fan_in)
        W = jax.random.uniform(kw, (fan_in, fan_out), jnp.float32, -bound, bound)
        b = jax.random.uniform(kb, (1, fan_out), jnp.float32, -bound, bound)
        gamma = jnp.ones((1, fan_out), jnp.float32)
        beta = jnp.zeros((1, fan_out), jnp.float32)
        hidden.append({"W": W, "b": b, "gamma": gamma, "beta": beta})

    key, kw, kb = jax.random.split(key, 3)
    bound = 1.0 / jnp.sqrt(out_dims[0])
    Wout = jax.random.uniform(kw, out_dims, jnp.float32, -bound, bound)
    bout = jax.random.uniform(kb, (1, out_dims[1]), jnp.float32, -bound, bound)

    return {"hidden": hidden, "out": {"W": Wout, "b": bout}}


def pack_params(params, dim_input, dim_hidden):
    """Pack per-layer params into two dense slabs (done once, outside the hot path)."""
    P = max(dim_input, dim_hidden)       # padded feature width (32 here)
    Ws, Vs = [], []
    for layer in params["hidden"]:
        W = layer["W"]                                   # (fan_in, fan_out)
        fi, fo = W.shape
        Wp = jnp.zeros((P, P), jnp.float32).at[:fi, :fo].set(W)
        vec = jnp.zeros((4, P), jnp.float32)
        vec = vec.at[0, :fo].set(layer["b"][0])
        vec = vec.at[1, :fo].set(layer["gamma"][0])
        vec = vec.at[2, :fo].set(layer["beta"][0])
        Ws.append(Wp)
        Vs.append(vec)

    Wo = params["out"]["W"]                              # (fan_in, 1)
    bo = params["out"]["b"]                              # (1, 1)
    fi = Wo.shape[0]
    vec = jnp.zeros((4, P), jnp.float32)
    vec = vec.at[0, :fi].set(Wo[:, 0])                   # transposed output weight
    vec = vec.at[1, :].set(bo[0, 0])                     # output bias (broadcast)
    Vs.append(vec)

    return jnp.stack(Ws), jnp.stack(Vs)                  # (15,P,P), (16,4,P)


@functools.partial(jax.jit, static_argnames=())
def mlp_forward(x, w_stack, v_stack):
    B, F = x.shape
    P = w_stack.shape[-1]
    # Zero-pad input features to the padded lane width (layout plumbing only).
    xp = jnp.zeros((B, P), jnp.float32).at[:, :F].set(x)

    # Tiny problem (B=8, P=32): everything fits in VMEM as single full blocks,
    # so no grid / BlockSpec tiling is needed. Only 3 input DMAs are issued.
    return pl.pallas_call(
        mlp_kernel,
        out_shape=jax.ShapeDtypeStruct((B, 1), jnp.float32),
    )(xp, w_stack, v_stack)


if __name__ == "__main__":
    dim_input, dim_hidden, batch = 16, 32, 8

    key = jax.random.PRNGKey(0)
    key, kx, kp = jax.random.split(key, 3)

    x = jax.random.normal(kx, (batch, dim_input), jnp.float32)
    params = init_params(kp, dim_input, dim_hidden)
    w_stack, v_stack = pack_params(params, dim_input, dim_hidden)

    out = mlp_forward(x, w_stack, v_stack)
    jax.block_until_ready(out)
    assert out.shape == (batch, 1), out.shape
    print("KERNEL_OK")
</pallas_src>

<mosaic_0001>
module attributes {stable_mosaic.version = 11 : i64} {
  func.func @mlp_kernel(%arg0: memref<8x32xf32, #tpu.memory_space<vmem>>, %arg1: memref<15x32x32xf32, #tpu.memory_space<vmem>>, %arg2: memref<16x4x32xf32, #tpu.memory_space<vmem>>, %arg3: memref<8x1xf32, #tpu.memory_space<vmem>>) attributes {dimension_semantics = [], scalar_prefetch = 0 : i64, scratch_operands = 0 : i64, tpu.core_type = #tpu.core_type<tc>} {
    %c0 = arith.constant 0 : index
    %c0_0 = arith.constant 0 : index
    %0 = vector.load %arg0[%c0, %c0_0] : memref<8x32xf32, #tpu.memory_space<vmem>>, vector<8x32xf32>
    %c0_1 = arith.constant 0 : index
    %c0_2 = arith.constant 0 : index
    %c0_3 = arith.constant 0 : index
    %1 = vector.load %arg1[%c0_1, %c0_2, %c0_3] : memref<15x32x32xf32, #tpu.memory_space<vmem>>, vector<1x32x32xf32>
    %2 = vector.shape_cast %1 : vector<1x32x32xf32> to vector<32x32xf32>
    %3 = arith.truncf %2 : vector<32x32xf32> to vector<32x32xbf16>
    %c0_4 = arith.constant 0 : index
    %c0_5 = arith.constant 0 : index
    %c0_6 = arith.constant 0 : index
    %4 = vector.load %arg2[%c0_4, %c0_5, %c0_6] : memref<16x4x32xf32, #tpu.memory_space<vmem>>, vector<1x4x32xf32>
    %5 = vector.shape_cast %4 : vector<1x4x32xf32> to vector<4x32xf32>
    %6 = vector.extract_strided_slice %5 {offsets = [0, 0], sizes = [1, 32], strides = [1, 1]} : vector<4x32xf32> to vector<1x32xf32>
    %7 = vector.extract_strided_slice %5 {offsets = [1, 0], sizes = [1, 32], strides = [1, 1]} : vector<4x32xf32> to vector<1x32xf32>
    %8 = vector.extract_strided_slice %5 {offsets = [2, 0], sizes = [1, 32], strides = [1, 1]} : vector<4x32xf32> to vector<1x32xf32>
    %9 = arith.truncf %0 : vector<8x32xf32> to vector<8x32xbf16>
    %cst = arith.constant dense<0.000000e+00> : vector<8x32xf32>
    %10 = tpu.matmul %9, %3, %cst {dimension_numbers = #tpu.dot_dimension_numbers<[1], [0], [0], [1], [0, 0, 1, 1], [], []>} : vector<8x32xbf16>, vector<32x32xbf16>, vector<8x32xf32> -> vector<8x32xf32>
    %11 = vector.broadcast %6 : vector<1x32xf32> to vector<8x32xf32>
    %12 = arith.addf %10, %11 : vector<8x32xf32>
    %cst_7 = arith.constant 0.000000e+00 : f32
    %13 = vector.broadcast %cst_7 : f32 to vector<8x32xf32>
    %14 = arith.cmpf oge, %12, %13 : vector<8x32xf32>
    %cst_8 = arith.constant 0.00999999977 : f32
    %15 = vector.broadcast %cst_8 : f32 to vector<8x32xf32>
    %16 = arith.mulf %15, %12 : vector<8x32xf32>
    %17 = arith.select %14, %12, %16 : vector<8x32xi1>, vector<8x32xf32>
    %cst_9 = arith.constant dense<0.000000e+00> : vector<32xf32>
    %18 = vector.multi_reduction <add>, %17, %cst_9 [0] : vector<8x32xf32> to vector<32xf32>
    %19 = vector.shape_cast %18 : vector<32xf32> to vector<1x32xf32>
    %cst_10 = arith.constant 8.000000e+00 : f32
    %20 = vector.broadcast %cst_10 : f32 to vector<1x32xf32>
    %21 = arith.divf %19, %20 : vector<1x32xf32>
    %22 = arith.mulf %17, %17 : vector<8x32xf32>
    %cst_11 = arith.constant dense<0.000000e+00> : vector<32xf32>
    %23 = vector.multi_reduction <add>, %22, %cst_11 [0] : vector<8x32xf32> to vector<32xf32>
    %24 = vector.shape_cast %23 : vector<32xf32> to vector<1x32xf32>
    %cst_12 = arith.constant 8.000000e+00 : f32
    %25 = vector.broadcast %cst_12 : f32 to vector<1x32xf32>
    %26 = arith.divf %24, %25 : vector<1x32xf32>
    %27 = arith.mulf %21, %21 : vector<1x32xf32>
    %28 = arith.subf %26, %27 : vector<1x32xf32>
    %cst_13 = arith.constant 0.000000e+00 : f32
    %29 = vector.broadcast %cst_13 : f32 to vector<1x32xf32>
    %30 = arith.maximumf %28, %29 : vector<1x32xf32>
    %cst_14 = arith.constant 9.99999974E-6 : f32
    %31 = vector.broadcast %cst_14 : f32 to vector<1x32xf32>
    %32 = arith.addf %30, %31 : vector<1x32xf32>
    %33 = math.rsqrt %32 : vector<1x32xf32>
    %34 = arith.mulf %7, %33 : vector<1x32xf32>
    %35 = arith.mulf %21, %34 : vector<1x32xf32>
    %36 = arith.subf %8, %35 : vector<1x32xf32>
    %37 = vector.broadcast %34 : vector<1x32xf32> to vector<8x32xf32>
    %38 = arith.mulf %17, %37 : vector<8x32xf32>
    %39 = vector.broadcast %36 : vector<1x32xf32> to vector<8x32xf32>
    %40 = arith.addf %38, %39 : vector<8x32xf32>
    %c1 = arith.constant 1 : index
    %c0_15 = arith.constant 0 : index
    %c0_16 = arith.constant 0 : index
    %41 = vector.load %arg1[%c1, %c0_15, %c0_16] : memref<15x32x32xf32, #tpu.memory_space<vmem>>, vector<1x32x32xf32>
    %42 = vector.shape_cast %41 : vector<1x32x32xf32> to vector<32x32xf32>
    %43 = arith.truncf %42 : vector<32x32xf32> to vector<32x32xbf16>
    %c1_17 = arith.constant 1 : index
    %c0_18 = arith.constant 0 : index
    %c0_19 = arith.constant 0 : index
    %44 = vector.load %arg2[%c1_17, %c0_18, %c0_19] : memref<16x4x32xf32, #tpu.memory_space<vmem>>, vector<1x4x32xf32>
    %45 = vector.shape_cast %44 : vector<1x4x32xf32> to vector<4x32xf32>
    %46 = vector.extract_strided_slice %45 {offsets = [0, 0], sizes = [1, 32], strides = [1, 1]} : vector<4x32xf32> to vector<1x32xf32>
    %47 = vector.extract_strided_slice %45 {offsets = [1, 0], sizes = [1, 32], strides = [1, 1]} : vector<4x32xf32> to vector<1x32xf32>
    %48 = vector.extract_strided_slice %45 {offsets = [2, 0], sizes = [1, 32], strides = [1, 1]} : vector<4x32xf32> to vector<1x32xf32>
    %49 = arith.truncf %40 : vector<8x32xf32> to vector<8x32xbf16>
    %cst_20 = arith.constant dense<0.000000e+00> : vector<8x32xf32>
    %50 = tpu.matmul %49, %43, %cst_20 {dimension_numbers = #tpu.dot_dimension_numbers<[1], [0], [0], [1], [0, 0, 1, 1], [], []>} : vector<8x32xbf16>, vector<32x32xbf16>, vector<8x32xf32> -> vector<8x32xf32>
    %51 = vector.broadcast %46 : vector<1x32xf32> to vector<8x32xf32>
    %52 = arith.addf %50, %51 : vector<8x32xf32>
    %cst_21 = arith.constant 0.000000e+00 : f32
    %53 = vector.broadcast %cst_21 : f32 to vector<8x32xf32>
    %54 = arith.cmpf oge, %52, %53 : vector<8x32xf32>
    %cst_22 = arith.constant 0.00999999977 : f32
    %55 = vector.broadcast %cst_22 : f32 to vector<8x32xf32>
    %56 = arith.mulf %55, %52 : vector<8x32xf32>
    %57 = arith.select %54, %52, %56 : vector<8x32xi1>, vector<8x32xf32>
    %cst_23 = arith.constant dense<0.000000e+00> : vector<32xf32>
    %58 = vector.multi_reduction <add>, %57, %cst_23 [0] : vector<8x32xf32> to vector<32xf32>
    %59 = vector.shape_cast %58 : vector<32xf32> to vector<1x32xf32>
    %cst_24 = arith.constant 8.000000e+00 : f32
    %60 = vector.broadcast %cst_24 : f32 to vector<1x32xf32>
    %61 = arith.divf %59, %60 : vector<1x32xf32>
    %62 = arith.mulf %57, %57 : vector<8x32xf32>
    %cst_25 = arith.constant dense<0.000000e+00> : vector<32xf32>
    %63 = vector.multi_reduction <add>, %62, %cst_25 [0] : vector<8x32xf32> to vector<32xf32>
    %64 = vector.shape_cast %63 : vector<32xf32> to vector<1x32xf32>
    %cst_26 = arith.constant 8.000000e+00 : f32
    %65 = vector.broadcast %cst_26 : f32 to vector<1x32xf32>
    %66 = arith.divf %64, %65 : vector<1x32xf32>
    %67 = arith.mulf %61, %61 : vector<1x32xf32>
    %68 = arith.subf %66, %67 : vector<1x32xf32>
    %cst_27 = arith.constant 0.000000e+00 : f32
    %69 = vector.broadcast %cst_27 : f32 to vector<1x32xf32>
    %70 = arith.maximumf %68, %69 : vector<1x32xf32>
    %cst_28 = arith.constant 9.99999974E-6 : f32
    %71 = vector.broadcast %cst_28 : f32 to vector<1x32xf32>
    %72 = arith.addf %70, %71 : vector<1x32xf32>
    %73 = math.rsqrt %72 : vector<1x32xf32>
    %74 = arith.mulf %47, %73 : vector<1x32xf32>
    %75 = arith.mulf %61, %74 : vector<1x32xf32>
    %76 = arith.subf %48, %75 : vector<1x32xf32>
    %77 = vector.broadcast %74 : vector<1x32xf32> to vector<8x32xf32>
    %78 = arith.mulf %57, %77 : vector<8x32xf32>
    %79 = vector.broadcast %76 : vector<1x32xf32> to vector<8x32xf32>
    %80 = arith.addf %78, %79 : vector<8x32xf32>
    %c2 = arith.constant 2 : index
    %c0_29 = arith.constant 0 : index
    %c0_30 = arith.constant 0 : index
    %81 = vector.load %arg1[%c2, %c0_29, %c0_30] : memref<15x32x32xf32, #tpu.memory_space<vmem>>, vector<1x32x32xf32>
    %82 = vector.shape_cast %81 : vector<1x32x32xf32> to vector<32x32xf32>
    %83 = arith.truncf %82 : vector<32x32xf32> to vector<32x32xbf16>
    %c2_31 = arith.constant 2 : index
    %c0_32 = arith.constant 0 : index
    %c0_33 = arith.constant 0 : index
    %84 = vector.load %arg2[%c2_31, %c0_32, %c0_33] : memref<16x4x32xf32, #tpu.memory_space<vmem>>, vector<1x4x32xf32>
    %85 = vector.shape_cast %84 : vector<1x4x32xf32> to vector<4x32xf32>
    %86 = vector.extract_strided_slice %85 {offsets = [0, 0], sizes = [1, 32], strides = [1, 1]} : vector<4x32xf32> to vector<1x32xf32>
    %87 = vector.extract_strided_slice %85 {offsets = [1, 0], sizes = [1, 32], strides = [1, 1]} : vector<4x32xf32> to vector<1x32xf32>
    %88 = vector.extract_strided_slice %85 {offsets = [2, 0], sizes = [1, 32], strides = [1, 1]} : vector<4x32xf32> to vector<1x32xf32>
    %89 = arith.truncf %80 : vector<8x32xf32> to vector<8x32xbf16>
    %cst_34 = arith.constant dense<0.000000e+00> : vector<8x32xf32>
    %90 = tpu.matmul %89, %83, %cst_34 {dimension_numbers = #tpu.dot_dimension_numbers<[1], [0], [0], [1], [0, 0, 1, 1], [], []>} : vector<8x32xbf16>, vector<32x32xbf16>, vector<8x32xf32> -> vector<8x32xf32>
    %91 = vector.broadcast %86 : vector<1x32xf32> to vector<8x32xf32>
    %92 = arith.addf %90, %91 : vector<8x32xf32>
    %cst_35 = arith.constant 0.000000e+00 : f32
    %93 = vector.broadcast %cst_35 : f32 to vector<8x32xf32>
    %94 = arith.cmpf oge, %92, %93 : vector<8x32xf32>
    %cst_36 = arith.constant 0.00999999977 : f32
    %95 = vector.broadcast %cst_36 : f32 to vector<8x32xf32>
    %96 = arith.mulf %95, %92 : vector<8x32xf32>
    %97 = arith.select %94, %92, %96 : vector<8x32xi1>, vector<8x32xf32>
    %cst_37 = arith.constant dense<0.000000e+00> : vector<32xf32>
    %98 = vector.multi_reduction <add>, %97, %cst_37 [0] : vector<8x32xf32> to vector<32xf32>
    %99 = vector.shape_cast %98 : vector<32xf32> to vector<1x32xf32>
    %cst_38 = arith.constant 8.000000e+00 : f32
    %100 = vector.broadcast %cst_38 : f32 to vector<1x32xf32>
    %101 = arith.divf %99, %100 : vector<1x32xf32>
    %102 = arith.mulf %97, %97 : vector<8x32xf32>
    %cst_39 = arith.constant dense<0.000000e+00> : vector<32xf32>
    %103 = vector.multi_reduction <add>, %102, %cst_39 [0] : vector<8x32xf32> to vector<32xf32>
    %104 = vector.shape_cast %103 : vector<32xf32> to vector<1x32xf32>
    %cst_40 = arith.constant 8.000000e+00 : f32
    %105 = vector.broadcast %cst_40 : f32 to vector<1x32xf32>
    %106 = arith.divf %104, %105 : vector<1x32xf32>
    %107 = arith.mulf %101, %101 : vector<1x32xf32>
    %108 = arith.subf %106, %107 : vector<1x32xf32>
    %cst_41 = arith.constant 0.000000e+00 : f32
    %109 = vector.broadcast %cst_41 : f32 to vector<1x32xf32>
    %110 = arith.maximumf %108, %109 : vector<1x32xf32>
    %cst_42 = arith.constant 9.99999974E-6 : f32
    %111 = vector.broadcast %cst_42 : f32 to vector<1x32xf32>
    %112 = arith.addf %110, %111 : vector<1x32xf32>
    %113 = math.rsqrt %112 : vector<1x32xf32>
    %114 = arith.mulf %87, %113 : vector<1x32xf32>
    %115 = arith.mulf %101, %114 : vector<1x32xf32>
    %116 = arith.subf %88, %115 : vector<1x32xf32>
    %117 = vector.broadcast %114 : vector<1x32xf32> to vector<8x32xf32>
    %118 = arith.mulf %97, %117 : vector<8x32xf32>
    %119 = vector.broadcast %116 : vector<1x32xf32> to vector<8x32xf32>
    %120 = arith.addf %118, %119 : vector<8x32xf32>
    %c3 = arith.constant 3 : index
    %c0_43 = arith.constant 0 : index
    %c0_44 = arith.constant 0 : index
    %121 = vector.load %arg1[%c3, %c0_43, %c0_44] : memref<15x32x32xf32, #tpu.memory_space<vmem>>, vector<1x32x32xf32>
    %122 = vector.shape_cast %121 : vector<1x32x32xf32> to vector<32x32xf32>
    %123 = arith.truncf %122 : vector<32x32xf32> to vector<32x32xbf16>
    %c3_45 = arith.constant 3 : index
    %c0_46 = arith.constant 0 : index
    %c0_47 = arith.constant 0 : index
    %124 = vector.load %arg2[%c3_45, %c0_46, %c0_47] : memref<16x4x32xf32, #tpu.memory_space<vmem>>, vector<1x4x32xf32>
    %125 = vector.shape_cast %124 : vector<1x4x32xf32> to vector<4x32xf32>
    %126 = vector.extract_strided_slice %125 {offsets = [0, 0], sizes = [1, 32], strides = [1, 1]} : vector<4x32xf32> to vector<1x32xf32>
    %127 = vector.extract_strided_slice %125 {offsets = [1, 0], sizes = [1, 32], strides = [1, 1]} : vector<4x32xf32> to vector<1x32xf32>
    %128 = vector.extract_strided_slice %125 {offsets = [2, 0], sizes = [1, 32], strides = [1, 1]} : vector<4x32xf32> to vector<1x32xf32>
    %129 = arith.truncf %120 : vector<8x32xf32> to vector<8x32xbf16>
    %cst_48 = arith.constant dense<0.000000e+00> : vector<8x32xf32>
    %130 = tpu.matmul %129, %123, %cst_48 {dimension_numbers = #tpu.dot_dimension_numbers<[1], [0], [0], [1], [0, 0, 1, 1], [], []>} : vector<8x32xbf16>, vector<32x32xbf16>, vector<8x32xf32> -> vector<8x32xf32>
    %131 = vector.broadcast %126 : vector<1x32xf32> to vector<8x32xf32>
    %132 = arith.addf %130, %131 : vector<8x32xf32>
    %cst_49 = arith.constant 0.000000e+00 : f32
    %133 = vector.broadcast %cst_49 : f32 to vector<8x32xf32>
    %134 = arith.cmpf oge, %132, %133 : vector<8x32xf32>
    %cst_50 = arith.constant 0.00999999977 : f32
    %135 = vector.broadcast %cst_50 : f32 to vector<8x32xf32>
    %136 = arith.mulf %135, %132 : vector<8x32xf32>
    %137 = arith.select %134, %132, %136 : vector<8x32xi1>, vector<8x32xf32>
    %cst_51 = arith.constant dense<0.000000e+00> : vector<32xf32>
    %138 = vector.multi_reduction <add>, %137, %cst_51 [0] : vector<8x32xf32> to vector<32xf32>
    %139 = vector.shape_cast %138 : vector<32xf32> to vector<1x32xf32>
    %cst_52 = arith.constant 8.000000e+00 : f32
    %140 = vector.broadcast %cst_52 : f32 to vector<1x32xf32>
    %141 = arith.divf %139, %140 : vector<1x32xf32>
    %142 = arith.mulf %137, %137 : vector<8x32xf32>
    %cst_53 = arith.constant dense<0.000000e+00> : vector<32xf32>
    %143 = vector.multi_reduction <add>, %142, %cst_53 [0] : vector<8x32xf32> to vector<32xf32>
    %144 = vector.shape_cast %143 : vector<32xf32> to vector<1x32xf32>
    %cst_54 = arith.constant 8.000000e+00 : f32
    %145 = vector.broadcast %cst_54 : f32 to vector<1x32xf32>
    %146 = arith.divf %144, %145 : vector<1x32xf32>
    %147 = arith.mulf %141, %141 : vector<1x32xf32>
    %148 = arith.subf %146, %147 : vector<1x32xf32>
    %cst_55 = arith.constant 0.000000e+00 : f32
    %149 = vector.broadcast %cst_55 : f32 to vector<1x32xf32>
    %150 = arith.maximumf %148, %149 : vector<1x32xf32>
    %cst_56 = arith.constant 9.99999974E-6 : f32
    %151 = vector.broadcast %cst_56 : f32 to vector<1x32xf32>
    %152 = arith.addf %150, %151 : vector<1x32xf32>
    %153 = math.rsqrt %152 : vector<1x32xf32>
    %154 = arith.mulf %127, %153 : vector<1x32xf32>
    %155 = arith.mulf %141, %154 : vector<1x32xf32>
    %156 = arith.subf %128, %155 : vector<1x32xf32>
    %157 = vector.broadcast %154 : vector<1x32xf32> to vector<8x32xf32>
    %158 = arith.mulf %137, %157 : vector<8x32xf32>
    %159 = vector.broadcast %156 : vector<1x32xf32> to vector<8x32xf32>
    %160 = arith.addf %158, %159 : vector<8x32xf32>
    %c4 = arith.constant 4 : index
    %c0_57 = arith.constant 0 : index
    %c0_58 = arith.constant 0 : index
    %161 = vector.load %arg1[%c4, %c0_57, %c0_58] : memref<15x32x32xf32, #tpu.memory_space<vmem>>, vector<1x32x32xf32>
    %162 = vector.shape_cast %161 : vector<1x32x32xf32> to vector<32x32xf32>
    %163 = arith.truncf %162 : vector<32x32xf32> to vector<32x32xbf16>
    %c4_59 = arith.constant 4 : index
    %c0_60 = arith.constant 0 : index
    %c0_61 = arith.constant 0 : index
    %164 = vector.load %arg2[%c4_59, %c0_60, %c0_61] : memref<16x4x32xf32, #tpu.memory_space<vmem>>, vector<1x4x32xf32>
    %165 = vector.shape_cast %164 : vector<1x4x32xf32> to vector<4x32xf32>
    %166 = vector.extract_strided_slice %165 {offsets = [0, 0], sizes = [1, 32], strides = [1, 1]} : vector<4x32xf32> to vector<1x32xf32>
    %167 = vector.extract_strided_slice %165 {offsets = [1, 0], sizes = [1, 32], strides = [1, 1]} : vector<4x32xf32> to vector<1x32xf32>
    %168 = vector.extract_strided_slice %165 {offsets = [2, 0], sizes = [1, 32], strides = [1, 1]} : vector<4x32xf32> to vector<1x32xf32>
    %169 = arith.truncf %160 : vector<8x32xf32> to vector<8x32xbf16>
    %cst_62 = arith.constant dense<0.000000e+00> : vector<8x32xf32>
    %170 = tpu.matmul %169, %163, %cst_62 {dimension_numbers = #tpu.dot_dimension_numbers<[1], [0], [0], [1], [0, 0, 1, 1], [], []>} : vector<8x32xbf16>, vector<32x32xbf16>, vector<8x32xf32> -> vector<8x32xf32>
    %171 = vector.broadcast %166 : vector<1x32xf32> to vector<8x32xf32>
    %172 = arith.addf %170, %171 : vector<8x32xf32>
    %cst_63 = arith.constant 0.000000e+00 : f32
    %173 = vector.broadcast %cst_63 : f32 to vector<8x32xf32>
    %174 = arith.cmpf oge, %172, %173 : vector<8x32xf32>
    %cst_64 = arith.constant 0.00999999977 : f32
    %175 = vector.broadcast %cst_64 : f32 to vector<8x32xf32>
    %176 = arith.mulf %175, %172 : vector<8x32xf32>
    %177 = arith.select %174, %172, %176 : vector<8x32xi1>, vector<8x32xf32>
    %cst_65 = arith.constant dense<0.000000e+00> : vector<32xf32>
    %178 = vector.multi_reduction <add>, %177, %cst_65 [0] : vector<8x32xf32> to vector<32xf32>
    %179 = vector.shape_cast %178 : vector<32xf32> to vector<1x32xf32>
    %cst_66 = arith.constant 8.000000e+00 : f32
    %180 = vector.broadcast %cst_66 : f32 to vector<1x32xf32>
    %181 = arith.divf %179, %180 : vector<1x32xf32>
    %182 = arith.mulf %177, %177 : vector<8x32xf32>
    %cst_67 = arith.constant dense<0.000000e+00> : vector<32xf32>
    %183 = vector.multi_reduction <add>, %182, %cst_67 [0] : vector<8x32xf32> to vector<32xf32>
    %184 = vector.shape_cast %183 : vector<32xf32> to vector<1x32xf32>
    %cst_68 = arith.constant 8.000000e+00 : f32
    %185 = vector.broadcast %cst_68 : f32 to vector<1x32xf32>
    %186 = arith.divf %184, %185 : vector<1x32xf32>
    %187 = arith.mulf %181, %181 : vector<1x32xf32>
    %188 = arith.subf %186, %187 : vector<1x32xf32>
    %cst_69 = arith.constant 0.000000e+00 : f32
    %189 = vector.broadcast %cst_69 : f32 to vector<1x32xf32>
    %190 = arith.maximumf %188, %189 : vector<1x32xf32>
    %cst_70 = arith.constant 9.99999974E-6 : f32
    %191 = vector.broadcast %cst_70 : f32 to vector<1x32xf32>
    %192 = arith.addf %190, %191 : vector<1x32xf32>
    %193 = math.rsqrt %192 : vector<1x32xf32>
    %194 = arith.mulf %167, %193 : vector<1x32xf32>
    %195 = arith.mulf %181, %194 : vector<1x32xf32>
    %196 = arith.subf %168, %195 : vector<1x32xf32>
    %197 = vector.broadcast %194 : vector<1x32xf32> to vector<8x32xf32>
    %198 = arith.mulf %177, %197 : vector<8x32xf32>
    %199 = vector.broadcast %196 : vector<1x32xf32> to vector<8x32xf32>
    %200 = arith.addf %198, %199 : vector<8x32xf32>
    %c5 = arith.constant 5 : index
    %c0_71 = arith.constant 0 : index
    %c0_72 = arith.constant 0 : index
    %201 = vector.load %arg1[%c5, %c0_71, %c0_72] : memref<15x32x32xf32, #tpu.memory_space<vmem>>, vector<1x32x32xf32>
    %202 = vector.shape_cast %201 : vector<1x32x32xf32> to vector<32x32xf32>
    %203 = arith.truncf %202 : vector<32x32xf32> to vector<32x32xbf16>
    %c5_73 = arith.constant 5 : index
    %c0_74 = arith.constant 0 : index
    %c0_75 = arith.constant 0 : index
    %204 = vector.load %arg2[%c5_73, %c0_74, %c0_75] : memref<16x4x32xf32, #tpu.memory_space<vmem>>, vector<1x4x32xf32>
    %205 = vector.shape_cast %204 : vector<1x4x32xf32> to vector<4x32xf32>
    %206 = vector.extract_strided_slice %205 {offsets = [0, 0], sizes = [1, 32], strides = [1, 1]} : vector<4x32xf32> to vector<1x32xf32>
    %207 = vector.extract_strided_slice %205 {offsets = [1, 0], sizes = [1, 32], strides = [1, 1]} : vector<4x32xf32> to vector<1x32xf32>
    %208 = vector.extract_strided_slice %205 {offsets = [2, 0], sizes = [1, 32], strides = [1, 1]} : vector<4x32xf32> to vector<1x32xf32>
    %209 = arith.truncf %200 : vector<8x32xf32> to vector<8x32xbf16>
    %cst_76 = arith.constant dense<0.000000e+00> : vector<8x32xf32>
    %210 = tpu.matmul %209, %203, %cst_76 {dimension_numbers = #tpu.dot_dimension_numbers<[1], [0], [0], [1], [0, 0, 1, 1], [], []>} : vector<8x32xbf16>, vector<32x32xbf16>, vector<8x32xf32> -> vector<8x32xf32>
    %211 = vector.broadcast %206 : vector<1x32xf32> to vector<8x32xf32>
    %212 = arith.addf %210, %211 : vector<8x32xf32>
    %cst_77 = arith.constant 0.000000e+00 : f32
    %213 = vector.broadcast %cst_77 : f32 to vector<8x32xf32>
    %214 = arith.cmpf oge, %212, %213 : vector<8x32xf32>
    %cst_78 = arith.constant 0.00999999977 : f32
    %215 = vector.broadcast %cst_78 : f32 to vector<8x32xf32>
    %216 = arith.mulf %215, %212 : vector<8x32xf32>
    %217 = arith.select %214, %212, %216 : vector<8x32xi1>, vector<8x32xf32>
    %cst_79 = arith.constant dense<0.000000e+00> : vector<32xf32>
    %218 = vector.multi_reduction <add>, %217, %cst_79 [0] : vector<8x32xf32> to vector<32xf32>
    %219 = vector.shape_cast %218 : vector<32xf32> to vector<1x32xf32>
    %cst_80 = arith.constant 8.000000e+00 : f32
    %220 = vector.broadcast %cst_80 : f32 to vector<1x32xf32>
    %221 = arith.divf %219, %220 : vector<1x32xf32>
    %222 = arith.mulf %217, %217 : vector<8x32xf32>
    %cst_81 = arith.constant dense<0.000000e+00> : vector<32xf32>
    %223 = vector.multi_reduction <add>, %222, %cst_81 [0] : vector<8x32xf32> to vector<32xf32>
    %224 = vector.shape_cast %223 : vector<32xf32> to vector<1x32xf32>
    %cst_82 = arith.constant 8.000000e+00 : f32
    %225 = vector.broadcast %cst_82 : f32 to vector<1x32xf32>
    %226 = arith.divf %224, %225 : vector<1x32xf32>
    %227 = arith.mulf %221, %221 : vector<1x32xf32>
    %228 = arith.subf %226, %227 : vector<1x32xf32>
    %cst_83 = arith.constant 0.000000e+00 : f32
    %229 = vector.broadcast %cst_83 : f32 to vector<1x32xf32>
    %230 = arith.maximumf %228, %229 : vector<1x32xf32>
    %cst_84 = arith.constant 9.99999974E-6 : f32
    %231 = vector.broadcast %cst_84 : f32 to vector<1x32xf32>
    %232 = arith.addf %230, %231 : vector<1x32xf32>
    %233 = math.rsqrt %232 : vector<1x32xf32>
    %234 = arith.mulf %207, %233 : vector<1x32xf32>
    %235 = arith.mulf %221, %234 : vector<1x32xf32>
    %236 = arith.subf %208, %235 : vector<1x32xf32>
    %237 = vector.broadcast %234 : vector<1x32xf32> to vector<8x32xf32>
    %238 = arith.mulf %217, %237 : vector<8x32xf32>
    %239 = vector.broadcast %236 : vector<1x32xf32> to vector<8x32xf32>
    %240 = arith.addf %238, %239 : vector<8x32xf32>
    %c6 = arith.constant 6 : index
    %c0_85 = arith.constant 0 : index
    %c0_86 = arith.constant 0 : index
    %241 = vector.load %arg1[%c6, %c0_85, %c0_86] : memref<15x32x32xf32, #tpu.memory_space<vmem>>, vector<1x32x32xf32>
    %242 = vector.shape_cast %241 : vector<1x32x32xf32> to vector<32x32xf32>
    %243 = arith.truncf %242 : vector<32x32xf32> to vector<32x32xbf16>
    %c6_87 = arith.constant 6 : index
    %c0_88 = arith.constant 0 : index
    %c0_89 = arith.constant 0 : index
    %244 = vector.load %arg2[%c6_87, %c0_88, %c0_89] : memref<16x4x32xf32, #tpu.memory_space<vmem>>, vector<1x4x32xf32>
    %245 = vector.shape_cast %244 : vector<1x4x32xf32> to vector<4x32xf32>
    %246 = vector.extract_strided_slice %245 {offsets = [0, 0], sizes = [1, 32], strides = [1, 1]} : vector<4x32xf32> to vector<1x32xf32>
    %247 = vector.extract_strided_slice %245 {offsets = [1, 0], sizes = [1, 32], strides = [1, 1]} : vector<4x32xf32> to vector<1x32xf32>
    %248 = vector.extract_strided_slice %245 {offsets = [2, 0], sizes = [1, 32], strides = [1, 1]} : vector<4x32xf32> to vector<1x32xf32>
    %249 = arith.truncf %240 : vector<8x32xf32> to vector<8x32xbf16>
    %cst_90 = arith.constant dense<0.000000e+00> : vector<8x32xf32>
    %250 = tpu.matmul %249, %243, %cst_90 {dimension_numbers = #tpu.dot_dimension_numbers<[1], [0], [0], [1], [0, 0, 1, 1], [], []>} : vector<8x32xbf16>, vector<32x32xbf16>, vector<8x32xf32> -> vector<8x32xf32>
    %251 = vector.broadcast %246 : vector<1x32xf32> to vector<8x32xf32>
    %252 = arith.addf %250, %251 : vector<8x32xf32>
    %cst_91 = arith.constant 0.000000e+00 : f32
    %253 = vector.broadcast %cst_91 : f32 to vector<8x32xf32>
    %254 = arith.cmpf oge, %252, %253 : vector<8x32xf32>
    %cst_92 = arith.constant 0.00999999977 : f32
    %255 = vector.broadcast %cst_92 : f32 to vector<8x32xf32>
    %256 = arith.mulf %255, %252 : vector<8x32xf32>
    %257 = arith.select %254, %252, %256 : vector<8x32xi1>, vector<8x32xf32>
    %cst_93 = arith.constant dense<0.000000e+00> : vector<32xf32>
    %258 = vector.multi_reduction <add>, %257, %cst_93 [0] : vector<8x32xf32> to vector<32xf32>
    %259 = vector.shape_cast %258 : vector<32xf32> to vector<1x32xf32>
    %cst_94 = arith.constant 8.000000e+00 : f32
    %260 = vector.broadcast %cst_94 : f32 to vector<1x32xf32>
    %261 = arith.divf %259, %260 : vector<1x32xf32>
    %262 = arith.mulf %257, %257 : vector<8x32xf32>
    %cst_95 = arith.constant dense<0.000000e+00> : vector<32xf32>
    %263 = vector.multi_reduction <add>, %262, %cst_95 [0] : vector<8x32xf32> to vector<32xf32>
    %264 = vector.shape_cast %263 : vector<32xf32> to vector<1x32xf32>
    %cst_96 = arith.constant 8.000000e+00 : f32
    %265 = vector.broadcast %cst_96 : f32 to vector<1x32xf32>
    %266 = arith.divf %264, %265 : vector<1x32xf32>
    %267 = arith.mulf %261, %261 : vector<1x32xf32>
    %268 = arith.subf %266, %267 : vector<1x32xf32>
    %cst_97 = arith.constant 0.000000e+00 : f32
    %269 = vector.broadcast %cst_97 : f32 to vector<1x32xf32>
    %270 = arith.maximumf %268, %269 : vector<1x32xf32>
    %cst_98 = arith.constant 9.99999974E-6 : f32
    %271 = vector.broadcast %cst_98 : f32 to vector<1x32xf32>
    %272 = arith.addf %270, %271 : vector<1x32xf32>
    %273 = math.rsqrt %272 : vector<1x32xf32>
    %274 = arith.mulf %247, %273 : vector<1x32xf32>
    %275 = arith.mulf %261, %274 : vector<1x32xf32>
    %276 = arith.subf %248, %275 : vector<1x32xf32>
    %277 = vector.broadcast %274 : vector<1x32xf32> to vector<8x32xf32>
    %278 = arith.mulf %257, %277 : vector<8x32xf32>
    %279 = vector.broadcast %276 : vector<1x32xf32> to vector<8x32xf32>
    %280 = arith.addf %278, %279 : vector<8x32xf32>
    %c7 = arith.constant 7 : index
    %c0_99 = arith.constant 0 : index
    %c0_100 = arith.constant 0 : index
    %281 = vector.load %arg1[%c7, %c0_99, %c0_100] : memref<15x32x32xf32, #tpu.memory_space<vmem>>, vector<1x32x32xf32>
    %282 = vector.shape_cast %281 : vector<1x32x32xf32> to vector<32x32xf32>
    %283 = arith.truncf %282 : vector<32x32xf32> to vector<32x32xbf16>
    %c7_101 = arith.constant 7 : index
    %c0_102 = arith.constant 0 : index
    %c0_103 = arith.constant 0 : index
    %284 = vector.load %arg2[%c7_101, %c0_102, %c0_103] : memref<16x4x32xf32, #tpu.memory_space<vmem>>, vector<1x4x32xf32>
    %285 = vector.shape_cast %284 : vector<1x4x32xf32> to vector<4x32xf32>
    %286 = vector.extract_strided_slice %285 {offsets = [0, 0], sizes = [1, 32], strides = [1, 1]} : vector<4x32xf32> to vector<1x32xf32>
    %287 = vector.extract_strided_slice %285 {offsets = [1, 0], sizes = [1, 32], strides = [1, 1]} : vector<4x32xf32> to vector<1x32xf32>
    %288 = vector.extract_strided_slice %285 {offsets = [2, 0], sizes = [1, 32], strides = [1, 1]} : vector<4x32xf32> to vector<1x32xf32>
    %289 = arith.truncf %280 : vector<8x32xf32> to vector<8x32xbf16>
    %cst_104 = arith.constant dense<0.000000e+00> : vector<8x32xf32>
    %290 = tpu.matmul %289, %283, %cst_104 {dimension_numbers = #tpu.dot_dimension_numbers<[1], [0], [0], [1], [0, 0, 1, 1], [], []>} : vector<8x32xbf16>, vector<32x32xbf16>, vector<8x32xf32> -> vector<8x32xf32>
    %291 = vector.broadcast %286 : vector<1x32xf32> to vector<8x32xf32>
    %292 = arith.addf %290, %291 : vector<8x32xf32>
    %cst_105 = arith.constant 0.000000e+00 : f32
    %293 = vector.broadcast %cst_105 : f32 to vector<8x32xf32>
    %294 = arith.cmpf oge, %292, %293 : vector<8x32xf32>
    %cst_106 = arith.constant 0.00999999977 : f32
    %295 = vector.broadcast %cst_106 : f32 to vector<8x32xf32>
    %296 = arith.mulf %295, %292 : vector<8x32xf32>
    %297 = arith.select %294, %292, %296 : vector<8x32xi1>, vector<8x32xf32>
    %cst_107 = arith.constant dense<0.000000e+00> : vector<32xf32>
    %298 = vector.multi_reduction <add>, %297, %cst_107 [0] : vector<8x32xf32> to vector<32xf32>
    %299 = vector.shape_cast %298 : vector<32xf32> to vector<1x32xf32>
    %cst_108 = arith.constant 8.000000e+00 : f32
    %300 = vector.broadcast %cst_108 : f32 to vector<1x32xf32>
    %301 = arith.divf %299, %300 : vector<1x32xf32>
    %302 = arith.mulf %297, %297 : vector<8x32xf32>
    %cst_109 = arith.constant dense<0.000000e+00> : vector<32xf32>
    %303 = vector.multi_reduction <add>, %302, %cst_109 [0] : vector<8x32xf32> to vector<32xf32>
    %304 = vector.shape_cast %303 : vector<32xf32> to vector<1x32xf32>
    %cst_110 = arith.constant 8.000000e+00 : f32
    %305 = vector.broadcast %cst_110 : f32 to vector<1x32xf32>
    %306 = arith.divf %304, %305 : vector<1x32xf32>
    %307 = arith.mulf %301, %301 : vector<1x32xf32>
    %308 = arith.subf %306, %307 : vector<1x32xf32>
    %cst_111 = arith.constant 0.000000e+00 : f32
    %309 = vector.broadcast %cst_111 : f32 to vector<1x32xf32>
    %310 = arith.maximumf %308, %309 : vector<1x32xf32>
    %cst_112 = arith.constant 9.99999974E-6 : f32
    %311 = vector.broadcast %cst_112 : f32 to vector<1x32xf32>
    %312 = arith.addf %310, %311 : vector<1x32xf32>
    %313 = math.rsqrt %312 : vector<1x32xf32>
    %314 = arith.mulf %287, %313 : vector<1x32xf32>
    %315 = arith.mulf %301, %314 : vector<1x32xf32>
    %316 = arith.subf %288, %315 : vector<1x32xf32>
    %317 = vector.broadcast %314 : vector<1x32xf32> to vector<8x32xf32>
    %318 = arith.mulf %297, %317 : vector<8x32xf32>
    %319 = vector.broadcast %316 : vector<1x32xf32> to vector<8x32xf32>
    %320 = arith.addf %318, %319 : vector<8x32xf32>
    %c8 = arith.constant 8 : index
    %c0_113 = arith.constant 0 : index
    %c0_114 = arith.constant 0 : index
    %321 = vector.load %arg1[%c8, %c0_113, %c0_114] : memref<15x32x32xf32, #tpu.memory_space<vmem>>, vector<1x32x32xf32>
    %322 = vector.shape_cast %321 : vector<1x32x32xf32> to vector<32x32xf32>
    %323 = arith.truncf %322 : vector<32x32xf32> to vector<32x32xbf16>
    %c8_115 = arith.constant 8 : index
    %c0_116 = arith.constant 0 : index
    %c0_117 = arith.constant 0 : index
    %324 = vector.load %arg2[%c8_115, %c0_116, %c0_117] : memref<16x4x32xf32, #tpu.memory_space<vmem>>, vector<1x4x32xf32>
    %325 = vector.shape_cast %324 : vector<1x4x32xf32> to vector<4x32xf32>
    %326 = vector.extract_strided_slice %325 {offsets = [0, 0], sizes = [1, 32], strides = [1, 1]} : vector<4x32xf32> to vector<1x32xf32>
    %327 = vector.extract_strided_slice %325 {offsets = [1, 0], sizes = [1, 32], strides = [1, 1]} : vector<4x32xf32> to vector<1x32xf32>
    %328 = vector.extract_strided_slice %325 {offsets = [2, 0], sizes = [1, 32], strides = [1, 1]} : vector<4x32xf32> to vector<1x32xf32>
    %329 = arith.truncf %320 : vector<8x32xf32> to vector<8x32xbf16>
    %cst_118 = arith.constant dense<0.000000e+00> : vector<8x32xf32>
    %330 = tpu.matmul %329, %323, %cst_118 {dimension_numbers = #tpu.dot_dimension_numbers<[1], [0], [0], [1], [0, 0, 1, 1], [], []>} : vector<8x32xbf16>, vector<32x32xbf16>, vector<8x32xf32> -> vector<8x32xf32>
    %331 = vector.broadcast %326 : vector<1x32xf32> to vector<8x32xf32>
    %332 = arith.addf %330, %331 : vector<8x32xf32>
    %cst_119 = arith.constant 0.000000e+00 : f32
    %333 = vector.broadcast %cst_119 : f32 to vector<8x32xf32>
    %334 = arith.cmpf oge, %332, %333 : vector<8x32xf32>
    %cst_120 = arith.constant 0.00999999977 : f32
    %335 = vector.broadcast %cst_120 : f32 to vector<8x32xf32>
    %336 = arith.mulf %335, %332 : vector<8x32xf32>
    %337 = arith.select %334, %332, %336 : vector<8x32xi1>, vector<8x32xf32>
    %cst_121 = arith.constant dense<0.000000e+00> : vector<32xf32>
    %338 = vector.multi_reduction <add>, %337, %cst_121 [0] : vector<8x32xf32> to vector<32xf32>
    %339 = vector.shape_cast %338 : vector<32xf32> to vector<1x32xf32>
    %cst_122 = arith.constant 8.000000e+00 : f32
    %340 = vector.broadcast %cst_122 : f32 to vector<1x32xf32>
    %341 = arith.divf %339, %340 : vector<1x32xf32>
    %342 = arith.mulf %337, %337 : vector<8x32xf32>
    %cst_123 = arith.constant dense<0.000000e+00> : vector<32xf32>
    %343 = vector.multi_reduction <add>, %342, %cst_123 [0] : vector<8x32xf32> to vector<32xf32>
    %344 = vector.shape_cast %343 : vector<32xf32> to vector<1x32xf32>
    %cst_124 = arith.constant 8.000000e+00 : f32
    %345 = vector.broadcast %cst_124 : f32 to vector<1x32xf32>
    %346 = arith.divf %344, %345 : vector<1x32xf32>
    %347 = arith.mulf %341, %341 : vector<1x32xf32>
    %348 = arith.subf %346, %347 : vector<1x32xf32>
    %cst_125 = arith.constant 0.000000e+00 : f32
    %349 = vector.broadcast %cst_125 : f32 to vector<1x32xf32>
    %350 = arith.maximumf %348, %349 : vector<1x32xf32>
    %cst_126 = arith.constant 9.99999974E-6 : f32
    %351 = vector.broadcast %cst_126 : f32 to vector<1x32xf32>
    %352 = arith.addf %350, %351 : vector<1x32xf32>
    %353 = math.rsqrt %352 : vector<1x32xf32>
    %354 = arith.mulf %327, %353 : vector<1x32xf32>
    %355 = arith.mulf %341, %354 : vector<1x32xf32>
    %356 = arith.subf %328, %355 : vector<1x32xf32>
    %357 = vector.broadcast %354 : vector<1x32xf32> to vector<8x32xf32>
    %358 = arith.mulf %337, %357 : vector<8x32xf32>
    %359 = vector.broadcast %356 : vector<1x32xf32> to vector<8x32xf32>
    %360 = arith.addf %358, %359 : vector<8x32xf32>
    %c9 = arith.constant 9 : index
    %c0_127 = arith.constant 0 : index
    %c0_128 = arith.constant 0 : index
    %361 = vector.load %arg1[%c9, %c0_127, %c0_128] : memref<15x32x32xf32, #tpu.memory_space<vmem>>, vector<1x32x32xf32>
    %362 = vector.shape_cast %361 : vector<1x32x32xf32> to vector<32x32xf32>
    %363 = arith.truncf %362 : vector<32x32xf32> to vector<32x32xbf16>
    %c9_129 = arith.constant 9 : index
    %c0_130 = arith.constant 0 : index
    %c0_131 = arith.constant 0 : index
    %364 = vector.load %arg2[%c9_129, %c0_130, %c0_131] : memref<16x4x32xf32, #tpu.memory_space<vmem>>, vector<1x4x32xf32>
    %365 = vector.shape_cast %364 : vector<1x4x32xf32> to vector<4x32xf32>
    %366 = vector.extract_strided_slice %365 {offsets = [0, 0], sizes = [1, 32], strides = [1, 1]} : vector<4x32xf32> to vector<1x32xf32>
    %367 = vector.extract_strided_slice %365 {offsets = [1, 0], sizes = [1, 32], strides = [1, 1]} : vector<4x32xf32> to vector<1x32xf32>
    %368 = vector.extract_strided_slice %365 {offsets = [2, 0], sizes = [1, 32], strides = [1, 1]} : vector<4x32xf32> to vector<1x32xf32>
    %369 = arith.truncf %360 : vector<8x32xf32> to vector<8x32xbf16>
    %cst_132 = arith.constant dense<0.000000e+00> : vector<8x32xf32>
    %370 = tpu.matmul %369, %363, %cst_132 {dimension_numbers = #tpu.dot_dimension_numbers<[1], [0], [0], [1], [0, 0, 1, 1], [], []>} : vector<8x32xbf16>, vector<32x32xbf16>, vector<8x32xf32> -> vector<8x32xf32>
    %371 = vector.broadcast %366 : vector<1x32xf32> to vector<8x32xf32>
    %372 = arith.addf %370, %371 : vector<8x32xf32>
    %cst_133 = arith.constant 0.000000e+00 : f32
    %373 = vector.broadcast %cst_133 : f32 to vector<8x32xf32>
    %374 = arith.cmpf oge, %372, %373 : vector<8x32xf32>
    %cst_134 = arith.constant 0.00999999977 : f32
    %375 = vector.broadcast %cst_134 : f32 to vector<8x32xf32>
    %376 = arith.mulf %375, %372 : vector<8x32xf32>
    %377 = arith.select %374, %372, %376 : vector<8x32xi1>, vector<8x32xf32>
    %cst_135 = arith.constant dense<0.000000e+00> : vector<32xf32>
    %378 = vector.multi_reduction <add>, %377, %cst_135 [0] : vector<8x32xf32> to vector<32xf32>
    %379 = vector.shape_cast %378 : vector<32xf32> to vector<1x32xf32>
    %cst_136 = arith.constant 8.000000e+00 : f32
    %380 = vector.broadcast %cst_136 : f32 to vector<1x32xf32>
    %381 = arith.divf %379, %380 : vector<1x32xf32>
    %382 = arith.mulf %377, %377 : vector<8x32xf32>
    %cst_137 = arith.constant dense<0.000000e+00> : vector<32xf32>
    %383 = vector.multi_reduction <add>, %382, %cst_137 [0] : vector<8x32xf32> to vector<32xf32>
    %384 = vector.shape_cast %383 : vector<32xf32> to vector<1x32xf32>
    %cst_138 = arith.constant 8.000000e+00 : f32
    %385 = vector.broadcast %cst_138 : f32 to vector<1x32xf32>
    %386 = arith.divf %384, %385 : vector<1x32xf32>
    %387 = arith.mulf %381, %381 : vector<1x32xf32>
    %388 = arith.subf %386, %387 : vector<1x32xf32>
    %cst_139 = arith.constant 0.000000e+00 : f32
    %389 = vector.broadcast %cst_139 : f32 to vector<1x32xf32>
    %390 = arith.maximumf %388, %389 : vector<1x32xf32>
    %cst_140 = arith.constant 9.99999974E-6 : f32
    %391 = vector.broadcast %cst_140 : f32 to vector<1x32xf32>
    %392 = arith.addf %390, %391 : vector<1x32xf32>
    %393 = math.rsqrt %392 : vector<1x32xf32>
    %394 = arith.mulf %367, %393 : vector<1x32xf32>
    %395 = arith.mulf %381, %394 : vector<1x32xf32>
    %396 = arith.subf %368, %395 : vector<1x32xf32>
    %397 = vector.broadcast %394 : vector<1x32xf32> to vector<8x32xf32>
    %398 = arith.mulf %377, %397 : vector<8x32xf32>
    %399 = vector.broadcast %396 : vector<1x32xf32> to vector<8x32xf32>
    %400 = arith.addf %398, %399 : vector<8x32xf32>
    %c10 = arith.constant 10 : index
    %c0_141 = arith.constant 0 : index
    %c0_142 = arith.constant 0 : index
    %401 = vector.load %arg1[%c10, %c0_141, %c0_142] : memref<15x32x32xf32, #tpu.memory_space<vmem>>, vector<1x32x32xf32>
    %402 = vector.shape_cast %401 : vector<1x32x32xf32> to vector<32x32xf32>
    %403 = arith.truncf %402 : vector<32x32xf32> to vector<32x32xbf16>
    %c10_143 = arith.constant 10 : index
    %c0_144 = arith.constant 0 : index
    %c0_145 = arith.constant 0 : index
    %404 = vector.load %arg2[%c10_143, %c0_144, %c0_145] : memref<16x4x32xf32, #tpu.memory_space<vmem>>, vector<1x4x32xf32>
    %405 = vector.shape_cast %404 : vector<1x4x32xf32> to vector<4x32xf32>
    %406 = vector.extract_strided_slice %405 {offsets = [0, 0], sizes = [1, 32], strides = [1, 1]} : vector<4x32xf32> to vector<1x32xf32>
    %407 = vector.extract_strided_slice %405 {offsets = [1, 0], sizes = [1, 32], strides = [1, 1]} : vector<4x32xf32> to vector<1x32xf32>
    %408 = vector.extract_strided_slice %405 {offsets = [2, 0], sizes = [1, 32], strides = [1, 1]} : vector<4x32xf32> to vector<1x32xf32>
    %409 = arith.truncf %400 : vector<8x32xf32> to vector<8x32xbf16>
    %cst_146 = arith.constant dense<0.000000e+00> : vector<8x32xf32>
    %410 = tpu.matmul %409, %403, %cst_146 {dimension_numbers = #tpu.dot_dimension_numbers<[1], [0], [0], [1], [0, 0, 1, 1], [], []>} : vector<8x32xbf16>, vector<32x32xbf16>, vector<8x32xf32> -> vector<8x32xf32>
    %411 = vector.broadcast %406 : vector<1x32xf32> to vector<8x32xf32>
    %412 = arith.addf %410, %411 : vector<8x32xf32>
    %cst_147 = arith.constant 0.000000e+00 : f32
    %413 = vector.broadcast %cst_147 : f32 to vector<8x32xf32>
    %414 = arith.cmpf oge, %412, %413 : vector<8x32xf32>
    %cst_148 = arith.constant 0.00999999977 : f32
    %415 = vector.broadcast %cst_148 : f32 to vector<8x32xf32>
    %416 = arith.mulf %415, %412 : vector<8x32xf32>
    %417 = arith.select %414, %412, %416 : vector<8x32xi1>, vector<8x32xf32>
    %cst_149 = arith.constant dense<0.000000e+00> : vector<32xf32>
    %418 = vector.multi_reduction <add>, %417, %cst_149 [0] : vector<8x32xf32> to vector<32xf32>
    %419 = vector.shape_cast %418 : vector<32xf32> to vector<1x32xf32>
    %cst_150 = arith.constant 8.000000e+00 : f32
    %420 = vector.broadcast %cst_150 : f32 to vector<1x32xf32>
    %421 = arith.divf %419, %420 : vector<1x32xf32>
    %422 = arith.mulf %417, %417 : vector<8x32xf32>
    %cst_151 = arith.constant dense<0.000000e+00> : vector<32xf32>
    %423 = vector.multi_reduction <add>, %422, %cst_151 [0] : vector<8x32xf32> to vector<32xf32>
    %424 = vector.shape_cast %423 : vector<32xf32> to vector<1x32xf32>
    %cst_152 = arith.constant 8.000000e+00 : f32
    %425 = vector.broadcast %cst_152 : f32 to vector<1x32xf32>
    %426 = arith.divf %424, %425 : vector<1x32xf32>
    %427 = arith.mulf %421, %421 : vector<1x32xf32>
    %428 = arith.subf %426, %427 : vector<1x32xf32>
    %cst_153 = arith.constant 0.000000e+00 : f32
    %429 = vector.broadcast %cst_153 : f32 to vector<1x32xf32>
    %430 = arith.maximumf %428, %429 : vector<1x32xf32>
    %cst_154 = arith.constant 9.99999974E-6 : f32
    %431 = vector.broadcast %cst_154 : f32 to vector<1x32xf32>
    %432 = arith.addf %430, %431 : vector<1x32xf32>
    %433 = math.rsqrt %432 : vector<1x32xf32>
    %434 = arith.mulf %407, %433 : vector<1x32xf32>
    %435 = arith.mulf %421, %434 : vector<1x32xf32>
    %436 = arith.subf %408, %435 : vector<1x32xf32>
    %437 = vector.broadcast %434 : vector<1x32xf32> to vector<8x32xf32>
    %438 = arith.mulf %417, %437 : vector<8x32xf32>
    %439 = vector.broadcast %436 : vector<1x32xf32> to vector<8x32xf32>
    %440 = arith.addf %438, %439 : vector<8x32xf32>
    %c11 = arith.constant 11 : index
    %c0_155 = arith.constant 0 : index
    %c0_156 = arith.constant 0 : index
    %441 = vector.load %arg1[%c11, %c0_155, %c0_156] : memref<15x32x32xf32, #tpu.memory_space<vmem>>, vector<1x32x32xf32>
    %442 = vector.shape_cast %441 : vector<1x32x32xf32> to vector<32x32xf32>
    %443 = arith.truncf %442 : vector<32x32xf32> to vector<32x32xbf16>
    %c11_157 = arith.constant 11 : index
    %c0_158 = arith.constant 0 : index
    %c0_159 = arith.constant 0 : index
    %444 = vector.load %arg2[%c11_157, %c0_158, %c0_159] : memref<16x4x32xf32, #tpu.memory_space<vmem>>, vector<1x4x32xf32>
    %445 = vector.shape_cast %444 : vector<1x4x32xf32> to vector<4x32xf32>
    %446 = vector.extract_strided_slice %445 {offsets = [0, 0], sizes = [1, 32], strides = [1, 1]} : vector<4x32xf32> to vector<1x32xf32>
    %447 = vector.extract_strided_slice %445 {offsets = [1, 0], sizes = [1, 32], strides = [1, 1]} : vector<4x32xf32> to vector<1x32xf32>
    %448 = vector.extract_strided_slice %445 {offsets = [2, 0], sizes = [1, 32], strides = [1, 1]} : vector<4x32xf32> to vector<1x32xf32>
    %449 = arith.truncf %440 : vector<8x32xf32> to vector<8x32xbf16>
    %cst_160 = arith.constant dense<0.000000e+00> : vector<8x32xf32>
    %450 = tpu.matmul %449, %443, %cst_160 {dimension_numbers = #tpu.dot_dimension_numbers<[1], [0], [0], [1], [0, 0, 1, 1], [], []>} : vector<8x32xbf16>, vector<32x32xbf16>, vector<8x32xf32> -> vector<8x32xf32>
    %451 = vector.broadcast %446 : vector<1x32xf32> to vector<8x32xf32>
    %452 = arith.addf %450, %451 : vector<8x32xf32>
    %cst_161 = arith.constant 0.000000e+00 : f32
    %453 = vector.broadcast %cst_161 : f32 to vector<8x32xf32>
    %454 = arith.cmpf oge, %452, %453 : vector<8x32xf32>
    %cst_162 = arith.constant 0.00999999977 : f32
    %455 = vector.broadcast %cst_162 : f32 to vector<8x32xf32>
    %456 = arith.mulf %455, %452 : vector<8x32xf32>
    %457 = arith.select %454, %452, %456 : vector<8x32xi1>, vector<8x32xf32>
    %cst_163 = arith.constant dense<0.000000e+00> : vector<32xf32>
    %458 = vector.multi_reduction <add>, %457, %cst_163 [0] : vector<8x32xf32> to vector<32xf32>
    %459 = vector.shape_cast %458 : vector<32xf32> to vector<1x32xf32>
    %cst_164 = arith.constant 8.000000e+00 : f32
    %460 = vector.broadcast %cst_164 : f32 to vector<1x32xf32>
    %461 = arith.divf %459, %460 : vector<1x32xf32>
    %462 = arith.mulf %457, %457 : vector<8x32xf32>
    %cst_165 = arith.constant dense<0.000000e+00> : vector<32xf32>
    %463 = vector.multi_reduction <add>, %462, %cst_165 [0] : vector<8x32xf32> to vector<32xf32>
    %464 = vector.shape_cast %463 : vector<32xf32> to vector<1x32xf32>
    %cst_166 = arith.constant 8.000000e+00 : f32
    %465 = vector.broadcast %cst_166 : f32 to vector<1x32xf32>
    %466 = arith.divf %464, %465 : vector<1x32xf32>
    %467 = arith.mulf %461, %461 : vector<1x32xf32>
    %468 = arith.subf %466, %467 : vector<1x32xf32>
    %cst_167 = arith.constant 0.000000e+00 : f32
    %469 = vector.broadcast %cst_167 : f32 to vector<1x32xf32>
    %470 = arith.maximumf %468, %469 : vector<1x32xf32>
    %cst_168 = arith.constant 9.99999974E-6 : f32
    %471 = vector.broadcast %cst_168 : f32 to vector<1x32xf32>
    %472 = arith.addf %470, %471 : vector<1x32xf32>
    %473 = math.rsqrt %472 : vector<1x32xf32>
    %474 = arith.mulf %447, %473 : vector<1x32xf32>
    %475 = arith.mulf %461, %474 : vector<1x32xf32>
    %476 = arith.subf %448, %475 : vector<1x32xf32>
    %477 = vector.broadcast %474 : vector<1x32xf32> to vector<8x32xf32>
    %478 = arith.mulf %457, %477 : vector<8x32xf32>
    %479 = vector.broadcast %476 : vector<1x32xf32> to vector<8x32xf32>
    %480 = arith.addf %478, %479 : vector<8x32xf32>
    %c12 = arith.constant 12 : index
    %c0_169 = arith.constant 0 : index
    %c0_170 = arith.constant 0 : index
    %481 = vector.load %arg1[%c12, %c0_169, %c0_170] : memref<15x32x32xf32, #tpu.memory_space<vmem>>, vector<1x32x32xf32>
    %482 = vector.shape_cast %481 : vector<1x32x32xf32> to vector<32x32xf32>
    %483 = arith.truncf %482 : vector<32x32xf32> to vector<32x32xbf16>
    %c12_171 = arith.constant 12 : index
    %c0_172 = arith.constant 0 : index
    %c0_173 = arith.constant 0 : index
    %484 = vector.load %arg2[%c12_171, %c0_172, %c0_173] : memref<16x4x32xf32, #tpu.memory_space<vmem>>, vector<1x4x32xf32>
    %485 = vector.shape_cast %484 : vector<1x4x32xf32> to vector<4x32xf32>
    %486 = vector.extract_strided_slice %485 {offsets = [0, 0], sizes = [1, 32], strides = [1, 1]} : vector<4x32xf32> to vector<1x32xf32>
    %487 = vector.extract_strided_slice %485 {offsets = [1, 0], sizes = [1, 32], strides = [1, 1]} : vector<4x32xf32> to vector<1x32xf32>
    %488 = vector.extract_strided_slice %485 {offsets = [2, 0], sizes = [1, 32], strides = [1, 1]} : vector<4x32xf32> to vector<1x32xf32>
    %489 = arith.truncf %480 : vector<8x32xf32> to vector<8x32xbf16>
    %cst_174 = arith.constant dense<0.000000e+00> : vector<8x32xf32>
    %490 = tpu.matmul %489, %483, %cst_174 {dimension_numbers = #tpu.dot_dimension_numbers<[1], [0], [0], [1], [0, 0, 1, 1], [], []>} : vector<8x32xbf16>, vector<32x32xbf16>, vector<8x32xf32> -> vector<8x32xf32>
    %491 = vector.broadcast %486 : vector<1x32xf32> to vector<8x32xf32>
    %492 = arith.addf %490, %491 : vector<8x32xf32>
    %cst_175 = arith.constant 0.000000e+00 : f32
    %493 = vector.broadcast %cst_175 : f32 to vector<8x32xf32>
    %494 = arith.cmpf oge, %492, %493 : vector<8x32xf32>
    %cst_176 = arith.constant 0.00999999977 : f32
    %495 = vector.broadcast %cst_176 : f32 to vector<8x32xf32>
    %496 = arith.mulf %495, %492 : vector<8x32xf32>
    %497 = arith.select %494, %492, %496 : vector<8x32xi1>, vector<8x32xf32>
    %cst_177 = arith.constant dense<0.000000e+00> : vector<32xf32>
    %498 = vector.multi_reduction <add>, %497, %cst_177 [0] : vector<8x32xf32> to vector<32xf32>
    %499 = vector.shape_cast %498 : vector<32xf32> to vector<1x32xf32>
    %cst_178 = arith.constant 8.000000e+00 : f32
    %500 = vector.broadcast %cst_178 : f32 to vector<1x32xf32>
    %501 = arith.divf %499, %500 : vector<1x32xf32>
    %502 = arith.mulf %497, %497 : vector<8x32xf32>
    %cst_179 = arith.constant dense<0.000000e+00> : vector<32xf32>
    %503 = vector.multi_reduction <add>, %502, %cst_179 [0] : vector<8x32xf32> to vector<32xf32>
    %504 = vector.shape_cast %503 : vector<32xf32> to vector<1x32xf32>
    %cst_180 = arith.constant 8.000000e+00 : f32
    %505 = vector.broadcast %cst_180 : f32 to vector<1x32xf32>
    %506 = arith.divf %504, %505 : vector<1x32xf32>
    %507 = arith.mulf %501, %501 : vector<1x32xf32>
    %508 = arith.subf %506, %507 : vector<1x32xf32>
    %cst_181 = arith.constant 0.000000e+00 : f32
    %509 = vector.broadcast %cst_181 : f32 to vector<1x32xf32>
    %510 = arith.maximumf %508, %509 : vector<1x32xf32>
    %cst_182 = arith.constant 9.99999974E-6 : f32
    %511 = vector.broadcast %cst_182 : f32 to vector<1x32xf32>
    %512 = arith.addf %510, %511 : vector<1x32xf32>
    %513 = math.rsqrt %512 : vector<1x32xf32>
    %514 = arith.mulf %487, %513 : vector<1x32xf32>
    %515 = arith.mulf %501, %514 : vector<1x32xf32>
    %516 = arith.subf %488, %515 : vector<1x32xf32>
    %517 = vector.broadcast %514 : vector<1x32xf32> to vector<8x32xf32>
    %518 = arith.mulf %497, %517 : vector<8x32xf32>
    %519 = vector.broadcast %516 : vector<1x32xf32> to vector<8x32xf32>
    %520 = arith.addf %518, %519 : vector<8x32xf32>
    %c13 = arith.constant 13 : index
    %c0_183 = arith.constant 0 : index
    %c0_184 = arith.constant 0 : index
    %521 = vector.load %arg1[%c13, %c0_183, %c0_184] : memref<15x32x32xf32, #tpu.memory_space<vmem>>, vector<1x32x32xf32>
    %522 = vector.shape_cast %521 : vector<1x32x32xf32> to vector<32x32xf32>
    %523 = arith.truncf %522 : vector<32x32xf32> to vector<32x32xbf16>
    %c13_185 = arith.constant 13 : index
    %c0_186 = arith.constant 0 : index
    %c0_187 = arith.constant 0 : index
    %524 = vector.load %arg2[%c13_185, %c0_186, %c0_187] : memref<16x4x32xf32, #tpu.memory_space<vmem>>, vector<1x4x32xf32>
    %525 = vector.shape_cast %524 : vector<1x4x32xf32> to vector<4x32xf32>
    %526 = vector.extract_strided_slice %525 {offsets = [0, 0], sizes = [1, 32], strides = [1, 1]} : vector<4x32xf32> to vector<1x32xf32>
    %527 = vector.extract_strided_slice %525 {offsets = [1, 0], sizes = [1, 32], strides = [1, 1]} : vector<4x32xf32> to vector<1x32xf32>
    %528 = vector.extract_strided_slice %525 {offsets = [2, 0], sizes = [1, 32], strides = [1, 1]} : vector<4x32xf32> to vector<1x32xf32>
    %529 = arith.truncf %520 : vector<8x32xf32> to vector<8x32xbf16>
    %cst_188 = arith.constant dense<0.000000e+00> : vector<8x32xf32>
    %530 = tpu.matmul %529, %523, %cst_188 {dimension_numbers = #tpu.dot_dimension_numbers<[1], [0], [0], [1], [0, 0, 1, 1], [], []>} : vector<8x32xbf16>, vector<32x32xbf16>, vector<8x32xf32> -> vector<8x32xf32>
    %531 = vector.broadcast %526 : vector<1x32xf32> to vector<8x32xf32>
    %532 = arith.addf %530, %531 : vector<8x32xf32>
    %cst_189 = arith.constant 0.000000e+00 : f32
    %533 = vector.broadcast %cst_189 : f32 to vector<8x32xf32>
    %534 = arith.cmpf oge, %532, %533 : vector<8x32xf32>
    %cst_190 = arith.constant 0.00999999977 : f32
    %535 = vector.broadcast %cst_190 : f32 to vector<8x32xf32>
    %536 = arith.mulf %535, %532 : vector<8x32xf32>
    %537 = arith.select %534, %532, %536 : vector<8x32xi1>, vector<8x32xf32>
    %cst_191 = arith.constant dense<0.000000e+00> : vector<32xf32>
    %538 = vector.multi_reduction <add>, %537, %cst_191 [0] : vector<8x32xf32> to vector<32xf32>
    %539 = vector.shape_cast %538 : vector<32xf32> to vector<1x32xf32>
    %cst_192 = arith.constant 8.000000e+00 : f32
    %540 = vector.broadcast %cst_192 : f32 to vector<1x32xf32>
    %541 = arith.divf %539, %540 : vector<1x32xf32>
    %542 = arith.mulf %537, %537 : vector<8x32xf32>
    %cst_193 = arith.constant dense<0.000000e+00> : vector<32xf32>
    %543 = vector.multi_reduction <add>, %542, %cst_193 [0] : vector<8x32xf32> to vector<32xf32>
    %544 = vector.shape_cast %543 : vector<32xf32> to vector<1x32xf32>
    %cst_194 = arith.constant 8.000000e+00 : f32
    %545 = vector.broadcast %cst_194 : f32 to vector<1x32xf32>
    %546 = arith.divf %544, %545 : vector<1x32xf32>
    %547 = arith.mulf %541, %541 : vector<1x32xf32>
    %548 = arith.subf %546, %547 : vector<1x32xf32>
    %cst_195 = arith.constant 0.000000e+00 : f32
    %549 = vector.broadcast %cst_195 : f32 to vector<1x32xf32>
    %550 = arith.maximumf %548, %549 : vector<1x32xf32>
    %cst_196 = arith.constant 9.99999974E-6 : f32
    %551 = vector.broadcast %cst_196 : f32 to vector<1x32xf32>
    %552 = arith.addf %550, %551 : vector<1x32xf32>
    %553 = math.rsqrt %552 : vector<1x32xf32>
    %554 = arith.mulf %527, %553 : vector<1x32xf32>
    %555 = arith.mulf %541, %554 : vector<1x32xf32>
    %556 = arith.subf %528, %555 : vector<1x32xf32>
    %557 = vector.broadcast %554 : vector<1x32xf32> to vector<8x32xf32>
    %558 = arith.mulf %537, %557 : vector<8x32xf32>
    %559 = vector.broadcast %556 : vector<1x32xf32> to vector<8x32xf32>
    %560 = arith.addf %558, %559 : vector<8x32xf32>
    %c14 = arith.constant 14 : index
    %c0_197 = arith.constant 0 : index
    %c0_198 = arith.constant 0 : index
    %561 = vector.load %arg1[%c14, %c0_197, %c0_198] : memref<15x32x32xf32, #tpu.memory_space<vmem>>, vector<1x32x32xf32>
    %562 = vector.shape_cast %561 : vector<1x32x32xf32> to vector<32x32xf32>
    %563 = arith.truncf %562 : vector<32x32xf32> to vector<32x32xbf16>
    %c14_199 = arith.constant 14 : index
    %c0_200 = arith.constant 0 : index
    %c0_201 = arith.constant 0 : index
    %564 = vector.load %arg2[%c14_199, %c0_200, %c0_201] : memref<16x4x32xf32, #tpu.memory_space<vmem>>, vector<1x4x32xf32>
    %565 = vector.shape_cast %564 : vector<1x4x32xf32> to vector<4x32xf32>
    %566 = vector.extract_strided_slice %565 {offsets = [0, 0], sizes = [1, 32], strides = [1, 1]} : vector<4x32xf32> to vector<1x32xf32>
    %567 = vector.extract_strided_slice %565 {offsets = [1, 0], sizes = [1, 32], strides = [1, 1]} : vector<4x32xf32> to vector<1x32xf32>
    %568 = vector.extract_strided_slice %565 {offsets = [2, 0], sizes = [1, 32], strides = [1, 1]} : vector<4x32xf32> to vector<1x32xf32>
    %569 = arith.truncf %560 : vector<8x32xf32> to vector<8x32xbf16>
    %cst_202 = arith.constant dense<0.000000e+00> : vector<8x32xf32>
    %570 = tpu.matmul %569, %563, %cst_202 {dimension_numbers = #tpu.dot_dimension_numbers<[1], [0], [0], [1], [0, 0, 1, 1], [], []>} : vector<8x32xbf16>, vector<32x32xbf16>, vector<8x32xf32> -> vector<8x32xf32>
    %571 = vector.broadcast %566 : vector<1x32xf32> to vector<8x32xf32>
    %572 = arith.addf %570, %571 : vector<8x32xf32>
    %cst_203 = arith.constant 0.000000e+00 : f32
    %573 = vector.broadcast %cst_203 : f32 to vector<8x32xf32>
    %574 = arith.cmpf oge, %572, %573 : vector<8x32xf32>
    %cst_204 = arith.constant 0.00999999977 : f32
    %575 = vector.broadcast %cst_204 : f32 to vector<8x32xf32>
    %576 = arith.mulf %575, %572 : vector<8x32xf32>
    %577 = arith.select %574, %572, %576 : vector<8x32xi1>, vector<8x32xf32>
    %cst_205 = arith.constant dense<0.000000e+00> : vector<32xf32>
    %578 = vector.multi_reduction <add>, %577, %cst_205 [0] : vector<8x32xf32> to vector<32xf32>
    %579 = vector.shape_cast %578 : vector<32xf32> to vector<1x32xf32>
    %cst_206 = arith.constant 8.000000e+00 : f32
    %580 = vector.broadcast %cst_206 : f32 to vector<1x32xf32>
    %581 = arith.divf %579, %580 : vector<1x32xf32>
    %582 = arith.mulf %577, %577 : vector<8x32xf32>
    %cst_207 = arith.constant dense<0.000000e+00> : vector<32xf32>
    %583 = vector.multi_reduction <add>, %582, %cst_207 [0] : vector<8x32xf32> to vector<32xf32>
    %584 = vector.shape_cast %583 : vector<32xf32> to vector<1x32xf32>
    %cst_208 = arith.constant 8.000000e+00 : f32
    %585 = vector.broadcast %cst_208 : f32 to vector<1x32xf32>
    %586 = arith.divf %584, %585 : vector<1x32xf32>
    %587 = arith.mulf %581, %581 : vector<1x32xf32>
    %588 = arith.subf %586, %587 : vector<1x32xf32>
    %cst_209 = arith.constant 0.000000e+00 : f32
    %589 = vector.broadcast %cst_209 : f32 to vector<1x32xf32>
    %590 = arith.maximumf %588, %589 : vector<1x32xf32>
    %cst_210 = arith.constant 9.99999974E-6 : f32
    %591 = vector.broadcast %cst_210 : f32 to vector<1x32xf32>
    %592 = arith.addf %590, %591 : vector<1x32xf32>
    %593 = math.rsqrt %592 : vector<1x32xf32>
    %594 = arith.mulf %567, %593 : vector<1x32xf32>
    %595 = arith.mulf %581, %594 : vector<1x32xf32>
    %596 = arith.subf %568, %595 : vector<1x32xf32>
    %597 = vector.broadcast %594 : vector<1x32xf32> to vector<8x32xf32>
    %598 = arith.mulf %577, %597 : vector<8x32xf32>
    %599 = vector.broadcast %596 : vector<1x32xf32> to vector<8x32xf32>
    %600 = arith.addf %598, %599 : vector<8x32xf32>
    %c15 = arith.constant 15 : index
    %c0_211 = arith.constant 0 : index
    %c0_212 = arith.constant 0 : index
    %601 = vector.load %arg2[%c15, %c0_211, %c0_212] : memref<16x4x32xf32, #tpu.memory_space<vmem>>, vector<1x4x32xf32>
    %602 = vector.shape_cast %601 : vector<1x4x32xf32> to vector<4x32xf32>
    %603 = vector.extract_strided_slice %602 {offsets = [0, 0], sizes = [1, 32], strides = [1, 1]} : vector<4x32xf32> to vector<1x32xf32>
    %604 = vector.extract_strided_slice %602 {offsets = [1, 0], sizes = [1, 1], strides = [1, 1]} : vector<4x32xf32> to vector<1x1xf32>
    %605 = vector.broadcast %603 : vector<1x32xf32> to vector<8x32xf32>
    %606 = arith.mulf %600, %605 : vector<8x32xf32>
    %cst_213 = arith.constant dense<0.000000e+00> : vector<8xf32>
    %607 = vector.multi_reduction <add>, %606, %cst_213 [1] : vector<8x32xf32> to vector<8xf32>
    %608 = vector.shape_cast %607 : vector<8xf32> to vector<8x1xf32>
    %609 = vector.broadcast %604 : vector<1x1xf32> to vector<8x1xf32>
    %610 = arith.addf %608, %609 : vector<8x1xf32>
    %c0_214 = arith.constant 0 : index
    %c0_215 = arith.constant 0 : index
    %611 = vector.load %arg3[%c0_214, %c0_215] : memref<8x1xf32, #tpu.memory_space<vmem>>, vector<8x1xf32>
    tpu.vector_store %arg3[%c0_214, %c0_215], %610 {strides = array<i32>} : memref<8x1xf32, #tpu.memory_space<vmem>>, vector<8x1xf32>,
    return
  }
}

</mosaic_0001>

<llo_original>
// kernel: mlp_forward.1
$region0: #{mlp_forward.1}
  #allocation0 [shape = 'u32[]', space=smem, size = 0x4, offset = 0x4, fixed_abs, tag = 'smem constant byte address 0x4 - core index']
  #allocation1 [shape = 'u32[144,128]{1,0:T(1,128)}', space=vmem, size = 0x12000, scoped, tag = 'internal scratch']
  %s0 = inlined_call_operand.vmem [shape: f32[8,32], index: 0, kind: input, shape index: {}]
  %s1 = inlined_call_operand.hbm [shape: f32[15,32,32], index: 1, kind: input, shape index: {}]
  %s2 = inlined_call_operand.hbm [shape: f32[16,4,32], index: 2, kind: input, shape index: {}]
  %s3 = inlined_call_operand.vmem [shape: f32[8,1], index: 3, kind: output, shape index: {}]
  %s4 = sld [smem:[#allocation0]]
  $region30: #{mlp_forward.1} parent=0
    _
  %s6 = ssub.s32 1, %s4
  %s7 = scalar_select 0, %s6, %s4
  $region1: #{mlp_forward.1} parent=0
    #allocation2 [shape = 'u8[245760]{0}', space=vmem, size = 0x3c000, scoped, tag = 'input window, operand 1, single buffered']
    #allocation3 [shape = 's32[1]{0}', space=sflag, size = 0x4, scoped, tag = 'scoped memory for mlp_forward.1']
    #allocation4 [shape = 'u8[32768]{0}', space=vmem, size = 0x8000, scoped, tag = 'input window, operand 2, single buffered']
    #allocation5 [shape = 's32[1]{0}', space=sflag, size = 0x4, scoped, tag = 'scoped memory for mlp_forward.1']
    %8 = vsyncpa [#allocation3], 0
    %9 = vsyncpa [#allocation5], 0
    // Predicated region
    $region2: #{mlp_forward.1} parent=1 // pred_check
      _
    $region3: #{mlp_forward.1} parent=1 // pred_check_branch
      %11 = sbr.rel (0) target = $region5
    $region4: #{mlp_forward.1} parent=1 // pred_region
      _
    $region5: #{mlp_forward.1} parent=1 // pred_fallthru
      _
    // Predicated region
    $region6: #{mlp_forward.1} parent=1 // pred_check
      _
    $region7: #{mlp_forward.1} parent=1 // pred_check_branch
      %13 = sbr.rel (0) target = $region9
    $region8: #{mlp_forward.1} parent=1 // pred_region
      %s15 = ssub.s32 7680, 7680
      %16 = vsyncadd [#allocation3], %s15
      %s17 = sshll.u32 [#allocation2], 4
      %s18 = int_to_ptr.vmem [resolvable:$true] %s17
      %23 = dma.hbm_to_vmem [thread:$0]  %s1, 7680, %s18, [#allocation3], 128, 128, 8
    $region9: #{mlp_forward.1} parent=1 // pred_fallthru
      _
    // Predicated region
    $region10: #{mlp_forward.1} parent=1 // pred_check
      _
    $region11: #{mlp_forward.1} parent=1 // pred_check_branch
      %25 = sbr.rel (0) target = $region13
    $region12: #{mlp_forward.1} parent=1 // pred_region
      %s27 = ssub.s32 1024, 1024
      %28 = vsyncadd [#allocation5], %s27
      %s29 = sshll.u32 [#allocation4], 4
      %s30 = int_to_ptr.vmem [resolvable:$true] %s29
      %35 = dma.hbm_to_vmem [thread:$0]  %s2, 1024, %s30, [#allocation5], 64, 64, 4
    $region13: #{mlp_forward.1} parent=1 // pred_fallthru
      _
    // Predicated region
    $region14: #{mlp_forward.1} parent=1 // pred_check
      _
    $region15: #{mlp_forward.1} parent=1 // pred_check_branch
      %37 = sbr.rel (0) target = $region17
    $region16: #{mlp_forward.1} parent=1 // pred_region
      %38 = dma.done [#allocation3], 7680
    $region17: #{mlp_forward.1} parent=1 // pred_fallthru
      _
    // Predicated region
    $region18: #{mlp_forward.1} parent=1 // pred_check
      _
    $region19: #{mlp_forward.1} parent=1 // pred_check_branch
      %40 = sbr.rel (0) target = $region21
    $region20: #{mlp_forward.1} parent=1 // pred_region
      %41 = dma.done [#allocation5], 1024
    $region21: #{mlp_forward.1} parent=1 // pred_fallthru
      _
    %v43 = vld [vmem:[%s0] sm:$0xff]
    %v44 = vld [vmem:[#allocation2] sm:$0xff]
    %v45 = vld [vmem:[#allocation2 + $0x8] sm:$0xff]
    %v46 = vld [vmem:[#allocation2 + $0x10] sm:$0xff]
    %v47 = vld [vmem:[#allocation2 + $0x18] sm:$0xff]
    %v48 = vpack.c.bf16 %v45, %v44
    %v49 = vpack.c.bf16 %v47, %v46
    %v50 = vld [vmem:[#allocation4] sm:$0xf]
    %v51 = vpack.c.bf16 %v43, %v43
    %v52 = vlaneseq
    %v53 = vshrl.u32 %v52, 7
    %v54 = vsub.s32 0, %v53
    %v55 = vrot.slane %v50, %v54
    %vm56 = vcmask 261120
    %v58 = vsel %vm56, %v51, 0
    %60 = vmatprep.subr.bf16.mxu0 0
    %61 = vmatpush1.bf16.msra.mxu0 %v48
    %62 = vmatprep.subr.bf16.mxu0 0
    %63 = vmatpush1.bf16.msra.mxu0 %v49
    %64 = vmatprep.subr.bf16.mxu0 0
    %65 = vmatpush1.bf16.msra.mxu0 0
    %66 = vmatprep.subr.bf16.mxu0 0
    %67 = vmatpush1.bf16.msra.mxu0 0
    %68 = vmatprep.subr.bf16.mxu0 0
    %69 = vmatpush1.bf16.msra.mxu0 0
    %70 = vmatprep.subr.bf16.mxu0 0
    %71 = vmatpush1.bf16.msra.mxu0 0
    %72 = vmatprep.subr.bf16.mxu0 0
    %73 = vmatpush1.bf16.msra.mxu0 0
    %74 = vmatprep.subr.bf16.mxu0 0
    %75 = vmatpush1.bf16.msra.mxu0 0
    %76 = vmatprep.subr.bf16.mxu0 0
    %77 = vmatpush1.bf16.msra.mxu0 0
    %78 = vmatprep.subr.bf16.mxu0 0
    %79 = vmatpush1.bf16.msra.mxu0 0
    %80 = vmatprep.subr.bf16.mxu0 0
    %81 = vmatpush1.bf16.msra.mxu0 0
    %82 = vmatprep.subr.bf16.mxu0 0
    %83 = vmatpush1.bf16.msra.mxu0 0
    %84 = vmatprep.subr.bf16.mxu0 0
    %85 = vmatpush1.bf16.msra.mxu0 0
    %86 = vmatprep.subr.bf16.mxu0 0
    %87 = vmatpush1.bf16.msra.mxu0 0
    %88 = vmatprep.subr.bf16.mxu0 0
    %89 = vmatpush1.bf16.msra.mxu0 0
    %90 = vmatprep.subr.bf16.mxu0 0
    %91 = vmatpush1.bf16.msra.mxu0 0
    %92 = vmatprep.mubr.bf16.mxu0 0
    %93 = vmatmul.mubr.bf16.gmra.mrb[0].mxu0 %v58
    %v94 = vpop.f32.mrb[0].mxu0
    %v95 = vadd.f32 %v55, %v94
    %v96 = vpop.f32.mrb[0].mxu0
    %v97 = vpop.f32.mrb[0].mxu0
    %v98 = vpop.f32.mrb[0].mxu0
    %99 = vdwg.mxu0
    %vm100 = vcmp.ge.f32.partialorder %v95, 0.0
    %v101 = vmul.f32 %v95, 0.01
    %v102 = vsel %vm100, %v95, %v101
    %v103 = vsel %vm56, %v102, 0.0
    %v104 = vrot.slane %v103, 4
    %v105 = vadd.f32 %v103, %v104
    %v106 = vrot.slane %v105, 2
    %v107 = vadd.f32 %v105, %v106
    %v108 = vrot.slane %v107, 1
    %v109 = vadd.f32 %v107, %v108
    %v110 = vrcp.pop 8.0
    %v111 = vmul.f32 %v109, %v110
    %v112 = vmul.f32 %v102, %v102
    %v113 = vsel %vm56, %v112, 0.0
    %v114 = vrot.slane %v113, 4
    %v115 = vadd.f32 %v113, %v114
    %v116 = vrot.slane %v115, 2
    %v117 = vadd.f32 %v115, %v116
    %v118 = vrot.slane %v117, 1
    %v119 = vadd.f32 %v117, %v118
    %v120 = vmul.f32 %v119, %v110
    %v121 = vmul.f32 %v111, %v111
    %v122 = vsub.f32 %v120, %v121
    %v123 = vmax.f32 %v122, 0.0
    %v124 = vadd.f32 %v123, 1e-05
    %v125 = vrsqrt.pop %v124
    %v126 = vmul.f32 %v50, %v125
    %v127 = vmul.f32 %v111, %v126
    %v129 = vrot.slane %v127, 7
    %v131 = vsub.f32 %v50, %v129
    %v132 = vlaneseq
    %v133 = vshrl.u32 %v132, 7
    %v134 = vsub.s32 1, %v133
    %v135 = vrot.slane %v126, %v134
    %v136 = vmul.f32 %v102, %v135
    %v137 = vlaneseq
    %v138 = vshrl.u32 %v137, 7
    %v139 = vsub.s32 2, %v138
    %v140 = vrot.slane %v131, %v139
    %v141 = vadd.f32 %v136, %v140
    %s142 = scalar_lea.vmem [#allocation2], 32
    %v143 = vld [vmem:[%s142] sm:$0xff]
    %v144 = vld [vmem:[%s142 + $0x8] sm:$0xff]
    %v145 = vld [vmem:[%s142 + $0x10] sm:$0xff]
    %v146 = vld [vmem:[%s142 + $0x18] sm:$0xff]
    %v147 = vpack.c.bf16 %v144, %v143
    %v148 = vpack.c.bf16 %v146, %v145
    %s149 = scalar_lea.vmem [#allocation4], 4
    %v150 = vld [vmem:[%s149] sm:$0xf]
    %v151 = vpack.c.bf16 %v141, %v141
    %v152 = vlaneseq
    %v153 = vshrl.u32 %v152, 7
    %v154 = vsub.s32 0, %v153
    %v155 = vrot.slane %v150, %v154
    %v157 = vsel %vm56, %v151, 0
    %159 = vmatprep.subr.bf16.mxu0 0
    %160 = vmatpush1.bf16.msra.mxu0 %v147
    %161 = vmatprep.subr.bf16.mxu0 0
    %162 = vmatpush1.bf16.msra.mxu0 %v148
    %163 = vmatprep.subr.bf16.mxu0 0
    %164 = vmatpush1.bf16.msra.mxu0 0
    %165 = vmatprep.subr.bf16.mxu0 0
    %166 = vmatpush1.bf16.msra.mxu0 0
    %167 = vmatprep.subr.bf16.mxu0 0
    %168 = vmatpush1.bf16.msra.mxu0 0
    %169 = vmatprep.subr.bf16.mxu0 0
    %170 = vmatpush1.bf16.msra.mxu0 0
    %171 = vmatprep.subr.bf16.mxu0 0
    %172 = vmatpush1.bf16.msra.mxu0 0
    %173 = vmatprep.subr.bf16.mxu0 0
    %174 = vmatpush1.bf16.msra.mxu0 0
    %175 = vmatprep.subr.bf16.mxu0 0
    %176 = vmatpush1.bf16.msra.mxu0 0
    %177 = vmatprep.subr.bf16.mxu0 0
    %178 = vmatpush1.bf16.msra.mxu0 0
    %179 = vmatprep.subr.bf16.mxu0 0
    %180 = vmatpush1.bf16.msra.mxu0 0
    %181 = vmatprep.subr.bf16.mxu0 0
    %182 = vmatpush1.bf16.msra.mxu0 0
    %183 = vmatprep.subr.bf16.mxu0 0
    %184 = vmatpush1.bf16.msra.mxu0 0
    %185 = vmatprep.subr.bf16.mxu0 0
    %186 = vmatpush1.bf16.msra.mxu0 0
    %187 = vmatprep.subr.bf16.mxu0 0
    %188 = vmatpush1.bf16.msra.mxu0 0
    %189 = vmatprep.subr.bf16.mxu0 0
    %190 = vmatpush1.bf16.msra.mxu0 0
    %191 = vmatprep.mubr.bf16.mxu0 0
    %192 = vmatmul.mubr.bf16.gmra.mrb[0].mxu0 %v157
    %v193 = vpop.f32.mrb[0].mxu0
    %v194 = vadd.f32 %v155, %v193
    %v195 = vpop.f32.mrb[0].mxu0
    %v196 = vpop.f32.mrb[0].mxu0
    %v197 = vpop.f32.mrb[0].mxu0
    %198 = vdwg.mxu0
    %vm199 = vcmp.ge.f32.partialorder %v194, 0.0
    %v200 = vmul.f32 %v194, 0.01
    %v201 = vsel %vm199, %v194, %v200
    %v202 = vsel %vm56, %v201, 0.0
    %v203 = vrot.slane %v202, 4
    %v204 = vadd.f32 %v202, %v203
    %v205 = vrot.slane %v204, 2
    %v206 = vadd.f32 %v204, %v205
    %v207 = vrot.slane %v206, 1
    %v208 = vadd.f32 %v206, %v207
    %v209 = vmul.f32 %v208, %v110
    %v210 = vmul.f32 %v201, %v201
    %v211 = vsel %vm56, %v210, 0.0
    %v212 = vrot.slane %v211, 4
    %v213 = vadd.f32 %v211, %v212
    %v214 = vrot.slane %v213, 2
    %v215 = vadd.f32 %v213, %v214
    %v216 = vrot.slane %v215, 1
    %v217 = vadd.f32 %v215, %v216
    %v218 = vmul.f32 %v217, %v110
    %v219 = vmul.f32 %v209, %v209
    %v220 = vsub.f32 %v218, %v219
    %v221 = vmax.f32 %v220, 0.0
    %v222 = vadd.f32 %v221, 1e-05
    %v223 = vrsqrt.pop %v222
    %v224 = vmul.f32 %v150, %v223
    %v225 = vmul.f32 %v209, %v224
    %v227 = vrot.slane %v225, 7
    %v229 = vsub.f32 %v150, %v227
    %v230 = vlaneseq
    %v231 = vshrl.u32 %v230, 7
    %v232 = vsub.s32 1, %v231
    %v233 = vrot.slane %v224, %v232
    %v234 = vmul.f32 %v201, %v233
    %v235 = vlaneseq
    %v236 = vshrl.u32 %v235, 7
    %v237 = vsub.s32 2, %v236
    %v238 = vrot.slane %v229, %v237
    %v239 = vadd.f32 %v234, %v238
    %s240 = scalar_lea.vmem [#allocation2], 64
    %v241 = vld [vmem:[%s240] sm:$0xff]
    %v242 = vld [vmem:[%s240 + $0x8] sm:$0xff]
    %v243 = vld [vmem:[%s240 + $0x10] sm:$0xff]
    %v244 = vld [vmem:[%s240 + $0x18] sm:$0xff]
    %v245 = vpack.c.bf16 %v242, %v241
    %v246 = vpack.c.bf16 %v244, %v243
    %s247 = scalar_lea.vmem [#allocation4], 8
    %v248 = vld [vmem:[%s247] sm:$0xf]
    %v249 = vpack.c.bf16 %v239, %v239
    %v250 = vlaneseq
    %v251 = vshrl.u32 %v250, 7
    %v252 = vsub.s32 0, %v251
    %v253 = vrot.slane %v248, %v252
    %v255 = vsel %vm56, %v249, 0
    %257 = vmatprep.subr.bf16.mxu0 0
    %258 = vmatpush1.bf16.msra.mxu0 %v245
    %259 = vmatprep.subr.bf16.mxu0 0
    %260 = vmatpush1.bf16.msra.mxu0 %v246
    %261 = vmatprep.subr.bf16.mxu0 0
    %262 = vmatpush1.bf16.msra.mxu0 0
    %263 = vmatprep.subr.bf16.mxu0 0
    %264 = vmatpush1.bf16.msra.mxu0 0
    %265 = vmatprep.subr.bf16.mxu0 0
    %266 = vmatpush1.bf16.msra.mxu0 0
    %267 = vmatprep.subr.bf16.mxu0 0
    %268 = vmatpush1.bf16.msra.mxu0 0
    %269 = vmatprep.subr.bf16.mxu0 0
    %270 = vmatpush1.bf16.msra.mxu0 0
    %271 = vmatprep.subr.bf16.mxu0 0
    %272 = vmatpush1.bf16.msra.mxu0 0
    %273 = vmatprep.subr.bf16.mxu0 0
    %274 = vmatpush1.bf16.msra.mxu0 0
    %275 = vmatprep.subr.bf16.mxu0 0
    %276 = vmatpush1.bf16.msra.mxu0 0
    %277 = vmatprep.subr.bf16.mxu0 0
    %278 = vmatpush1.bf16.msra.mxu0 0
    %279 = vmatprep.subr.bf16.mxu0 0
    %280 = vmatpush1.bf16.msra.mxu0 0
    %281 = vmatprep.subr.bf16.mxu0 0
    %282 = vmatpush1.bf16.msra.mxu0 0
    %283 = vmatprep.subr.bf16.mxu0 0
    %284 = vmatpush1.bf16.msra.mxu0 0
    %285 = vmatprep.subr.bf16.mxu0 0
    %286 = vmatpush1.bf16.msra.mxu0 0
    %287 = vmatprep.subr.bf16.mxu0 0
    %288 = vmatpush1.bf16.msra.mxu0 0
    %289 = vmatprep.mubr.bf16.mxu0 0
    %290 = vmatmul.mubr.bf16.gmra.mrb[0].mxu0 %v255
    %v291 = vpop.f32.mrb[0].mxu0
    %v292 = vadd.f32 %v253, %v291
    %v293 = vpop.f32.mrb[0].mxu0
    %v294 = vpop.f32.mrb[0].mxu0
    %v295 = vpop.f32.mrb[0].mxu0
    %296 = vdwg.mxu0
    %vm297 = vcmp.ge.f32.partialorder %v292, 0.0
    %v298 = vmul.f32 %v292, 0.01
    %v299 = vsel %vm297, %v292, %v298
    %v300 = vsel %vm56, %v299, 0.0
    %v301 = vrot.slane %v300, 4
    %v302 = vadd.f32 %v300, %v301
    %v303 = vrot.slane %v302, 2
    %v304 = vadd.f32 %v302, %v303
    %v305 = vrot.slane %v304, 1
    %v306 = vadd.f32 %v304, %v305
    %v307 = vmul.f32 %v306, %v110
    %v308 = vmul.f32 %v299, %v299
    %v309 = vsel %vm56, %v308, 0.0
    %v310 = vrot.slane %v309, 4
    %v311 = vadd.f32 %v309, %v310
    %v312 = vrot.slane %v311, 2
    %v313 = vadd.f32 %v311, %v312
    %v314 = vrot.slane %v313, 1
    %v315 = vadd.f32 %v313, %v314
    %v316 = vmul.f32 %v315, %v110
    %v317 = vmul.f32 %v307, %v307
    %v318 = vsub.f32 %v316, %v317
    %v319 = vmax.f32 %v318, 0.0
    %v320 = vadd.f32 %v319, 1e-05
    %v321 = vrsqrt.pop %v320
    %v322 = vmul.f32 %v248, %v321
    %v323 = vmul.f32 %v307, %v322
    %v325 = vrot.slane %v323, 7
    %v327 = vsub.f32 %v248, %v325
    %v328 = vlaneseq
    %v329 = vshrl.u32 %v328, 7
    %v330 = vsub.s32 1, %v329
    %v331 = vrot.slane %v322, %v330
    %v332 = vmul.f32 %v299, %v331
    %v333 = vlaneseq
    %v334 = vshrl.u32 %v333, 7
    %v335 = vsub.s32 2, %v334
    %v336 = vrot.slane %v327, %v335
    %v337 = vadd.f32 %v332, %v336
    %s338 = scalar_lea.vmem [#allocation2], 96
    %v339 = vld [vmem:[%s338] sm:$0xff]
    %v340 = vld [vmem:[%s338 + $0x8] sm:$0xff]
    %v341 = vld [vmem:[%s338 + $0x10] sm:$0xff]
    %v342 = vld [vmem:[%s338 + $0x18] sm:$0xff]
    %v343 = vpack.c.bf16 %v340, %v339
    %v344 = vpack.c.bf16 %v342, %v341
    %s345 = scalar_lea.vmem [#allocation4], 12
    %v346 = vld [vmem:[%s345] sm:$0xf]
    %v347 = vpack.c.bf16 %v337, %v337
    %v348 = vlaneseq
    %v349 = vshrl.u32 %v348, 7
    %v350 = vsub.s32 0, %v349
    %v351 = vrot.slane %v346, %v350
    %v353 = vsel %vm56, %v347, 0
    %355 = vmatprep.subr.bf16.mxu0 0
    %356 = vmatpush1.bf16.msra.mxu0 %v343
    %357 = vmatprep.subr.bf16.mxu0 0
    %358 = vmatpush1.bf16.msra.mxu0 %v344
    %359 = vmatprep.subr.bf16.mxu0 0
    %360 = vmatpush1.bf16.msra.mxu0 0
    %361 = vmatprep.subr.bf16.mxu0 0
    %362 = vmatpush1.bf16.msra.mxu0 0
    %363 = vmatprep.subr.bf16.mxu0 0
    %364 = vmatpush1.bf16.msra.mxu0 0
    %365 = vmatprep.subr.bf16.mxu0 0
    %366 = vmatpush1.bf16.msra.mxu0 0
    %367 = vmatprep.subr.bf16.mxu0 0
    %368 = vmatpush1.bf16.msra.mxu0 0
    %369 = vmatprep.subr.bf16.mxu0 0
    %370 = vmatpush1.bf16.msra.mxu0 0
    %371 = vmatprep.subr.bf16.mxu0 0
    %372 = vmatpush1.bf16.msra.mxu0 0
    %373 = vmatprep.subr.bf16.mxu0 0
    %374 = vmatpush1.bf16.msra.mxu0 0
    %375 = vmatprep.subr.bf16.mxu0 0
    %376 = vmatpush1.bf16.msra.mxu0 0
    %377 = vmatprep.subr.bf16.mxu0 0
    %378 = vmatpush1.bf16.msra.mxu0 0
    %379 = vmatprep.subr.bf16.mxu0 0
    %380 = vmatpush1.bf16.msra.mxu0 0
    %381 = vmatprep.subr.bf16.mxu0 0
    %382 = vmatpush1.bf16.msra.mxu0 0
    %383 = vmatprep.subr.bf16.mxu0 0
    %384 = vmatpush1.bf16.msra.mxu0 0
    %385 = vmatprep.subr.bf16.mxu0 0
    %386 = vmatpush1.bf16.msra.mxu0 0
    %387 = vmatprep.mubr.bf16.mxu0 0
    %388 = vmatmul.mubr.bf16.gmra.mrb[0].mxu0 %v353
    %v389 = vpop.f32.mrb[0].mxu0
    %v390 = vadd.f32 %v351, %v389
    %v391 = vpop.f32.mrb[0].mxu0
    %v392 = vpop.f32.mrb[0].mxu0
    %v393 = vpop.f32.mrb[0].mxu0
    %394 = vdwg.mxu0
    %vm395 = vcmp.ge.f32.partialorder %v390, 0.0
    %v396 = vmul.f32 %v390, 0.01
    %v397 = vsel %vm395, %v390, %v396
    %v398 = vsel %vm56, %v397, 0.0
    %v399 = vrot.slane %v398, 4
    %v400 = vadd.f32 %v398, %v399
    %v401 = vrot.slane %v400, 2
    %v402 = vadd.f32 %v400, %v401
    %v403 = vrot.slane %v402, 1
    %v404 = vadd.f32 %v402, %v403
    %v405 = vmul.f32 %v404, %v110
    %v406 = vmul.f32 %v397, %v397
    %v407 = vsel %vm56, %v406, 0.0
    %v408 = vrot.slane %v407, 4
    %v409 = vadd.f32 %v407, %v408
    %v410 = vrot.slane %v409, 2
    %v411 = vadd.f32 %v409, %v410
    %v412 = vrot.slane %v411, 1
    %v413 = vadd.f32 %v411, %v412
    %v414 = vmul.f32 %v413, %v110
    %v415 = vmul.f32 %v405, %v405
    %v416 = vsub.f32 %v414, %v415
    %v417 = vmax.f32 %v416, 0.0
    %v418 = vadd.f32 %v417, 1e-05
    %v419 = vrsqrt.pop %v418
    %v420 = vmul.f32 %v346, %v419
    %v421 = vmul.f32 %v405, %v420
    %v423 = vrot.slane %v421, 7
    %v425 = vsub.f32 %v346, %v423
    %v426 = vlaneseq
    %v427 = vshrl.u32 %v426, 7
    %v428 = vsub.s32 1, %v427
    %v429 = vrot.slane %v420, %v428
    %v430 = vmul.f32 %v397, %v429
    %v431 = vlaneseq
    %v432 = vshrl.u32 %v431, 7
    %v433 = vsub.s32 2, %v432
    %v434 = vrot.slane %v425, %v433
    %v435 = vadd.f32 %v430, %v434
    %s436 = scalar_lea.vmem [#allocation2], 128
    %v437 = vld [vmem:[%s436] sm:$0xff]
    %v438 = vld [vmem:[%s436 + $0x8] sm:$0xff]
    %v439 = vld [vmem:[%s436 + $0x10] sm:$0xff]
    %v440 = vld [vmem:[%s436 + $0x18] sm:$0xff]
    %v441 = vpack.c.bf16 %v438, %v437
    %v442 = vpack.c.bf16 %v440, %v439
    %s443 = scalar_lea.vmem [#allocation4], 16
    %v444 = vld [vmem:[%s443] sm:$0xf]
    %v445 = vpack.c.bf16 %v435, %v435
    %v446 = vlaneseq
    %v447 = vshrl.u32 %v446, 7
    %v448 = vsub.s32 0, %v447
    %v449 = vrot.slane %v444, %v448
    %v451 = vsel %vm56, %v445, 0
    %453 = vmatprep.subr.bf16.mxu0 0
    %454 = vmatpush1.bf16.msra.mxu0 %v441
    %455 = vmatprep.subr.bf16.mxu0 0
    %456 = vmatpush1.bf16.msra.mxu0 %v442
    %457 = vmatprep.subr.bf16.mxu0 0
    %458 = vmatpush1.bf16.msra.mxu0 0
    %459 = vmatprep.subr.bf16.mxu0 0
    %460 = vmatpush1.bf16.msra.mxu0 0
    %461 = vmatprep.subr.bf16.mxu0 0
    %462 = vmatpush1.bf16.msra.mxu0 0
    %463 = vmatprep.subr.bf16.mxu0 0
    %464 = vmatpush1.bf16.msra.mxu0 0
    %465 = vmatprep.subr.bf16.mxu0 0
    %466 = vmatpush1.bf16.msra.mxu0 0
    %467 = vmatprep.subr.bf16.mxu0 0
    %468 = vmatpush1.bf16.msra.mxu0 0
    %469 = vmatprep.subr.bf16.mxu0 0
    %470 = vmatpush1.bf16.msra.mxu0 0
    %471 = vmatprep.subr.bf16.mxu0 0
    %472 = vmatpush1.bf16.msra.mxu0 0
    %473 = vmatprep.subr.bf16.mxu0 0
    %474 = vmatpush1.bf16.msra.mxu0 0
    %475 = vmatprep.subr.bf16.mxu0 0
    %476 = vmatpush1.bf16.msra.mxu0 0
    %477 = vmatprep.subr.bf16.mxu0 0
    %478 = vmatpush1.bf16.msra.mxu0 0
    %479 = vmatprep.subr.bf16.mxu0 0
    %480 = vmatpush1.bf16.msra.mxu0 0
    %481 = vmatprep.subr.bf16.mxu0 0
    %482 = vmatpush1.bf16.msra.mxu0 0
    %483 = vmatprep.subr.bf16.mxu0 0
    %484 = vmatpush1.bf16.msra.mxu0 0
    %485 = vmatprep.mubr.bf16.mxu0 0
    %486 = vmatmul.mubr.bf16.gmra.mrb[0].mxu0 %v451
    %v487 = vpop.f32.mrb[0].mxu0
    %v488 = vadd.f32 %v449, %v487
    %v489 = vpop.f32.mrb[0].mxu0
    %v490 = vpop.f32.mrb[0].mxu0
    %v491 = vpop.f32.mrb[0].mxu0
    %492 = vdwg.mxu0
    %vm493 = vcmp.ge.f32.partialorder %v488, 0.0
    %v494 = vmul.f32 %v488, 0.01
    %v495 = vsel %vm493, %v488, %v494
    %v496 = vsel %vm56, %v495, 0.0
    %v497 = vrot.slane %v496, 4
    %v498 = vadd.f32 %v496, %v497
    %v499 = vrot.slane %v498, 2
    %v500 = vadd.f32 %v498, %v499
    %v501 = vrot.slane %v500, 1
    %v502 = vadd.f32 %v500, %v501
    %v503 = vmul.f32 %v502, %v110
    %v504 = vmul.f32 %v495, %v495
    %v505 = vsel %vm56, %v504, 0.0
    %v506 = vrot.slane %v505, 4
    %v507 = vadd.f32 %v505, %v506
    %v508 = vrot.slane %v507, 2
    %v509 = vadd.f32 %v507, %v508
    %v510 = vrot.slane %v509, 1
    %v511 = vadd.f32 %v509, %v510
    %v512 = vmul.f32 %v511, %v110
    %v513 = vmul.f32 %v503, %v503
    %v514 = vsub.f32 %v512, %v513
    %v515 = vmax.f32 %v514, 0.0
    %v516 = vadd.f32 %v515, 1e-05
    %v517 = vrsqrt.pop %v516
    %v518 = vmul.f32 %v444, %v517
    %v519 = vmul.f32 %v503, %v518
    %v521 = vrot.slane %v519, 7
    %v523 = vsub.f32 %v444, %v521
    %v524 = vlaneseq
    %v525 = vshrl.u32 %v524, 7
    %v526 = vsub.s32 1, %v525
    %v527 = vrot.slane %v518, %v526
    %v528 = vmul.f32 %v495, %v527
    %v529 = vlaneseq
    %v530 = vshrl.u32 %v529, 7
    %v531 = vsub.s32 2, %v530
    %v532 = vrot.slane %v523, %v531
    %v533 = vadd.f32 %v528, %v532
    %s534 = scalar_lea.vmem [#allocation2], 160
    %v535 = vld [vmem:[%s534] sm:$0xff]
    %v536 = vld [vmem:[%s534 + $0x8] sm:$0xff]
    %v537 = vld [vmem:[%s534 + $0x10] sm:$0xff]
    %v538 = vld [vmem:[%s534 + $0x18] sm:$0xff]
    %v539 = vpack.c.bf16 %v536, %v535
    %v540 = vpack.c.bf16 %v538, %v537
    %s541 = scalar_lea.vmem [#allocation4], 20
    %v542 = vld [vmem:[%s541] sm:$0xf]
    %v543 = vpack.c.bf16 %v533, %v533
    %v544 = vlaneseq
    %v545 = vshrl.u32 %v544, 7
    %v546 = vsub.s32 0, %v545
    %v547 = vrot.slane %v542, %v546
    %v549 = vsel %vm56, %v543, 0
    %551 = vmatprep.subr.bf16.mxu0 0
    %552 = vmatpush1.bf16.msra.mxu0 %v539
    %553 = vmatprep.subr.bf16.mxu0 0
    %554 = vmatpush1.bf16.msra.mxu0 %v540
    %555 = vmatprep.subr.bf16.mxu0 0
    %556 = vmatpush1.bf16.msra.mxu0 0
    %557 = vmatprep.subr.bf16.mxu0 0
    %558 = vmatpush1.bf16.msra.mxu0 0
    %559 = vmatprep.subr.bf16.mxu0 0
    %560 = vmatpush1.bf16.msra.mxu0 0
    %561 = vmatprep.subr.bf16.mxu0 0
    %562 = vmatpush1.bf16.msra.mxu0 0
    %563 = vmatprep.subr.bf16.mxu0 0
    %564 = vmatpush1.bf16.msra.mxu0 0
    %565 = vmatprep.subr.bf16.mxu0 0
    %566 = vmatpush1.bf16.msra.mxu0 0
    %567 = vmatprep.subr.bf16.mxu0 0
    %568 = vmatpush1.bf16.msra.mxu0 0
    %569 = vmatprep.subr.bf16.mxu0 0
    %570 = vmatpush1.bf16.msra.mxu0 0
    %571 = vmatprep.subr.bf16.mxu0 0
    %572 = vmatpush1.bf16.msra.mxu0 0
    %573 = vmatprep.subr.bf16.mxu0 0
    %574 = vmatpush1.bf16.msra.mxu0 0
    %575 = vmatprep.subr.bf16.mxu0 0
    %576 = vmatpush1.bf16.msra.mxu0 0
    %577 = vmatprep.subr.bf16.mxu0 0
    %578 = vmatpush1.bf16.msra.mxu0 0
    %579 = vmatprep.subr.bf16.mxu0 0
    %580 = vmatpush1.bf16.msra.mxu0 0
    %581 = vmatprep.subr.bf16.mxu0 0
    %582 = vmatpush1.bf16.msra.mxu0 0
    %583 = vmatprep.mubr.bf16.mxu0 0
    %584 = vmatmul.mubr.bf16.gmra.mrb[0].mxu0 %v549
    %v585 = vpop.f32.mrb[0].mxu0
    %v586 = vadd.f32 %v547, %v585
    %v587 = vpop.f32.mrb[0].mxu0
    %v588 = vpop.f32.mrb[0].mxu0
    %v589 = vpop.f32.mrb[0].mxu0
    %590 = vdwg.mxu0
    %vm591 = vcmp.ge.f32.partialorder %v586, 0.0
    %v592 = vmul.f32 %v586, 0.01
    %v593 = vsel %vm591, %v586, %v592
    %v594 = vsel %vm56, %v593, 0.0
    %v595 = vrot.slane %v594, 4
    %v596 = vadd.f32 %v594, %v595
    %v597 = vrot.slane %v596, 2
    %v598 = vadd.f32 %v596, %v597
    %v599 = vrot.slane %v598, 1
    %v600 = vadd.f32 %v598, %v599
    %v601 = vmul.f32 %v600, %v110
    %v602 = vmul.f32 %v593, %v593
    %v603 = vsel %vm56, %v602, 0.0
    %v604 = vrot.slane %v603, 4
    %v605 = vadd.f32 %v603, %v604
    %v606 = vrot.slane %v605, 2
    %v607 = vadd.f32 %v605, %v606
    %v608 = vrot.slane %v607, 1
    %v609 = vadd.f32 %v607, %v608
    %v610 = vmul.f32 %v609, %v110
    %v611 = vmul.f32 %v601, %v601
    %v612 = vsub.f32 %v610, %v611
    %v613 = vmax.f32 %v612, 0.0
    %v614 = vadd.f32 %v613, 1e-05
    %v615 = vrsqrt.pop %v614
    %v616 = vmul.f32 %v542, %v615
    %v617 = vmul.f32 %v601, %v616
    %v619 = vrot.slane %v617, 7
    %v621 = vsub.f32 %v542, %v619
    %v622 = vlaneseq
    %v623 = vshrl.u32 %v622, 7
    %v624 = vsub.s32 1, %v623
    %v625 = vrot.slane %v616, %v624
    %v626 = vmul.f32 %v593, %v625
    %v627 = vlaneseq
    %v628 = vshrl.u32 %v627, 7
    %v629 = vsub.s32 2, %v628
    %v630 = vrot.slane %v621, %v629
    %v631 = vadd.f32 %v626, %v630
    %s632 = scalar_lea.vmem [#allocation2], 192
    %v633 = vld [vmem:[%s632] sm:$0xff]
    %v634 = vld [vmem:[%s632 + $0x8] sm:$0xff]
    %v635 = vld [vmem:[%s632 + $0x10] sm:$0xff]
    %v636 = vld [vmem:[%s632 + $0x18] sm:$0xff]
    %v637 = vpack.c.bf16 %v634, %v633
    %v638 = vpack.c.bf16 %v636, %v635
    %s639 = scalar_lea.vmem [#allocation4], 24
    %v640 = vld [vmem:[%s639] sm:$0xf]
    %v641 = vpack.c.bf16 %v631, %v631
    %v642 = vlaneseq
    %v643 = vshrl.u32 %v642, 7
    %v644 = vsub.s32 0, %v643
    %v645 = vrot.slane %v640, %v644
    %v647 = vsel %vm56, %v641, 0
    %649 = vmatprep.subr.bf16.mxu0 0
    %650 = vmatpush1.bf16.msra.mxu0 %v637
    %651 = vmatprep.subr.bf16.mxu0 0
    %652 = vmatpush1.bf16.msra.mxu0 %v638
    %653 = vmatprep.subr.bf16.mxu0 0
    %654 = vmatpush1.bf16.msra.mxu0 0
    %655 = vmatprep.subr.bf16.mxu0 0
    %656 = vmatpush1.bf16.msra.mxu0 0
    %657 = vmatprep.subr.bf16.mxu0 0
    %658 = vmatpush1.bf16.msra.mxu0 0
    %659 = vmatprep.subr.bf16.mxu0 0
    %660 = vmatpush1.bf16.msra.mxu0 0
    %661 = vmatprep.subr.bf16.mxu0 0
    %662 = vmatpush1.bf16.msra.mxu0 0
    %663 = vmatprep.subr.bf16.mxu0 0
    %664 = vmatpush1.bf16.msra.mxu0 0
    %665 = vmatprep.subr.bf16.mxu0 0
    %666 = vmatpush1.bf16.msra.mxu0 0
    %667 = vmatprep.subr.bf16.mxu0 0
    %668 = vmatpush1.bf16.msra.mxu0 0
    %669 = vmatprep.subr.bf16.mxu0 0
    %670 = vmatpush1.bf16.msra.mxu0 0
    %671 = vmatprep.subr.bf16.mxu0 0
    %672 = vmatpush1.bf16.msra.mxu0 0
    %673 = vmatprep.subr.bf16.mxu0 0
    %674 = vmatpush1.bf16.msra.mxu0 0
    %675 = vmatprep.subr.bf16.mxu0 0
    %676 = vmatpush1.bf16.msra.mxu0 0
    %677 = vmatprep.subr.bf16.mxu0 0
    %678 = vmatpush1.bf16.msra.mxu0 0
    %679 = vmatprep.subr.bf16.mxu0 0
    %680 = vmatpush1.bf16.msra.mxu0 0
    %681 = vmatprep.mubr.bf16.mxu0 0
    %682 = vmatmul.mubr.bf16.gmra.mrb[0].mxu0 %v647
    %v683 = vpop.f32.mrb[0].mxu0
    %v684 = vadd.f32 %v645, %v683
    %v685 = vpop.f32.mrb[0].mxu0
    %v686 = vpop.f32.mrb[0].mxu0
    %v687 = vpop.f32.mrb[0].mxu0
    %688 = vdwg.mxu0
    %vm689 = vcmp.ge.f32.partialorder %v684, 0.0
    %v690 = vmul.f32 %v684, 0.01
    %v691 = vsel %vm689, %v684, %v690
    %v692 = vsel %vm56, %v691, 0.0
    %v693 = vrot.slane %v692, 4
    %v694 = vadd.f32 %v692, %v693
    %v695 = vrot.slane %v694, 2
    %v696 = vadd.f32 %v694, %v695
    %v697 = vrot.slane %v696, 1
    %v698 = vadd.f32 %v696, %v697
    %v699 = vmul.f32 %v698, %v110
    %v700 = vmul.f32 %v691, %v691
    %v701 = vsel %vm56, %v700, 0.0
    %v702 = vrot.slane %v701, 4
    %v703 = vadd.f32 %v701, %v702
    %v704 = vrot.slane %v703, 2
    %v705 = vadd.f32 %v703, %v704
    %v706 = vrot.slane %v705, 1
    %v707 = vadd.f32 %v705, %v706
    %v708 = vmul.f32 %v707, %v110
    %v709 = vmul.f32 %v699, %v699
    %v710 = vsub.f32 %v708, %v709
    %v711 = vmax.f32 %v710, 0.0
    %v712 = vadd.f32 %v711, 1e-05
    %v713 = vrsqrt.pop %v712
    %v714 = vmul.f32 %v640, %v713
    %v715 = vmul.f32 %v699, %v714
    %v717 = vrot.slane %v715, 7
    %v719 = vsub.f32 %v640, %v717
    %v720 = vlaneseq
    %v721 = vshrl.u32 %v720, 7
    %v722 = vsub.s32 1, %v721
    %v723 = vrot.slane %v714, %v722
    %v724 = vmul.f32 %v691, %v723
    %v725 = vlaneseq
    %v726 = vshrl.u32 %v725, 7
    %v727 = vsub.s32 2, %v726
    %v728 = vrot.slane %v719, %v727
    %v729 = vadd.f32 %v724, %v728
    %s730 = scalar_lea.vmem [#allocation2], 224
    %v731 = vld [vmem:[%s730] sm:$0xff]
    %v732 = vld [vmem:[%s730 + $0x8] sm:$0xff]
    %v733 = vld [vmem:[%s730 + $0x10] sm:$0xff]
    %v734 = vld [vmem:[%s730 + $0x18] sm:$0xff]
    %v735 = vpack.c.bf16 %v732, %v731
    %v736 = vpack.c.bf16 %v734, %v733
    %s737 = scalar_lea.vmem [#allocation4], 28
    %v738 = vld [vmem:[%s737] sm:$0xf]
    %v739 = vpack.c.bf16 %v729, %v729
    %v740 = vlaneseq
    %v741 = vshrl.u32 %v740, 7
    %v742 = vsub.s32 0, %v741
    %v743 = vrot.slane %v738, %v742
    %v745 = vsel %vm56, %v739, 0
    %747 = vmatprep.subr.bf16.mxu0 0
    %748 = vmatpush1.bf16.msra.mxu0 %v735
    %749 = vmatprep.subr.bf16.mxu0 0
    %750 = vmatpush1.bf16.msra.mxu0 %v736
    %751 = vmatprep.subr.bf16.mxu0 0
    %752 = vmatpush1.bf16.msra.mxu0 0
    %753 = vmatprep.subr.bf16.mxu0 0
    %754 = vmatpush1.bf16.msra.mxu0 0
    %755 = vmatprep.subr.bf16.mxu0 0
    %756 = vmatpush1.bf16.msra.mxu0 0
    %757 = vmatprep.subr.bf16.mxu0 0
    %758 = vmatpush1.bf16.msra.mxu0 0
    %759 = vmatprep.subr.bf16.mxu0 0
    %760 = vmatpush1.bf16.msra.mxu0 0
    %761 = vmatprep.subr.bf16.mxu0 0
    %762 = vmatpush1.bf16.msra.mxu0 0
    %763 = vmatprep.subr.bf16.mxu0 0
    %764 = vmatpush1.bf16.msra.mxu0 0
    %765 = vmatprep.subr.bf16.mxu0 0
    %766 = vmatpush1.bf16.msra.mxu0 0
    %767 = vmatprep.subr.bf16.mxu0 0
    %768 = vmatpush1.bf16.msra.mxu0 0
    %769 = vmatprep.subr.bf16.mxu0 0
    %770 = vmatpush1.bf16.msra.mxu0 0
    %771 = vmatprep.subr.bf16.mxu0 0
    %772 = vmatpush1.bf16.msra.mxu0 0
    %773 = vmatprep.subr.bf16.mxu0 0
    %774 = vmatpush1.bf16.msra.mxu0 0
    %775 = vmatprep.subr.bf16.mxu0 0
    %776 = vmatpush1.bf16.msra.mxu0 0
    %777 = vmatprep.subr.bf16.mxu0 0
    %778 = vmatpush1.bf16.msra.mxu0 0
    %779 = vmatprep.mubr.bf16.mxu0 0
    %780 = vmatmul.mubr.bf16.gmra.mrb[0].mxu0 %v745
    %v781 = vpop.f32.mrb[0].mxu0
    %v782 = vadd.f32 %v743, %v781
    %v783 = vpop.f32.mrb[0].mxu0
    %v784 = vpop.f32.mrb[0].mxu0
    %v785 = vpop.f32.mrb[0].mxu0
    %786 = vdwg.mxu0
    %vm787 = vcmp.ge.f32.partialorder %v782, 0.0
    %v788 = vmul.f32 %v782, 0.01
    %v789 = vsel %vm787, %v782, %v788
    %v790 = vsel %vm56, %v789, 0.0
    %v791 = vrot.slane %v790, 4
    %v792 = vadd.f32 %v790, %v791
    %v793 = vrot.slane %v792, 2
    %v794 = vadd.f32 %v792, %v793
    %v795 = vrot.slane %v794, 1
    %v796 = vadd.f32 %v794, %v795
    %v797 = vmul.f32 %v796, %v110
    %v798 = vmul.f32 %v789, %v789
    %v799 = vsel %vm56, %v798, 0.0
    %v800 = vrot.slane %v799, 4
    %v801 = vadd.f32 %v799, %v800
    %v802 = vrot.slane %v801, 2
    %v803 = vadd.f32 %v801, %v802
    %v804 = vrot.slane %v803, 1
    %v805 = vadd.f32 %v803, %v804
    %v806 = vmul.f32 %v805, %v110
    %v807 = vmul.f32 %v797, %v797
    %v808 = vsub.f32 %v806, %v807
    %v809 = vmax.f32 %v808, 0.0
    %v810 = vadd.f32 %v809, 1e-05
    %v811 = vrsqrt.pop %v810
    %v812 = vmul.f32 %v738, %v811
    %v813 = vmul.f32 %v797, %v812
    %v815 = vrot.slane %v813, 7
    %v817 = vsub.f32 %v738, %v815
    %v818 = vlaneseq
    %v819 = vshrl.u32 %v818, 7
    %v820 = vsub.s32 1, %v819
    %v821 = vrot.slane %v812, %v820
    %v822 = vmul.f32 %v789, %v821
    %v823 = vlaneseq
    %v824 = vshrl.u32 %v823, 7
    %v825 = vsub.s32 2, %v824
    %v826 = vrot.slane %v817, %v825
    %v827 = vadd.f32 %v822, %v826
    %s828 = scalar_lea.vmem [#allocation2], 256
    %v829 = vld [vmem:[%s828] sm:$0xff]
    %v830 = vld [vmem:[%s828 + $0x8] sm:$0xff]
    %v831 = vld [vmem:[%s828 + $0x10] sm:$0xff]
    %v832 = vld [vmem:[%s828 + $0x18] sm:$0xff]
    %v833 = vpack.c.bf16 %v830, %v829
    %v834 = vpack.c.bf16 %v832, %v831
    %s835 = scalar_lea.vmem [#allocation4], 32
    %v836 = vld [vmem:[%s835] sm:$0xf]
    %v837 = vpack.c.bf16 %v827, %v827
    %v838 = vlaneseq
    %v839 = vshrl.u32 %v838, 7
    %v840 = vsub.s32 0, %v839
    %v841 = vrot.slane %v836, %v840
    %v843 = vsel %vm56, %v837, 0
    %845 = vmatprep.subr.bf16.mxu0 0
    %846 = vmatpush1.bf16.msra.mxu0 %v833
    %847 = vmatprep.subr.bf16.mxu0 0
    %848 = vmatpush1.bf16.msra.mxu0 %v834
    %849 = vmatprep.subr.bf16.mxu0 0
    %850 = vmatpush1.bf16.msra.mxu0 0
    %851 = vmatprep.subr.bf16.mxu0 0
    %852 = vmatpush1.bf16.msra.mxu0 0
    %853 = vmatprep.subr.bf16.mxu0 0
    %854 = vmatpush1.bf16.msra.mxu0 0
    %855 = vmatprep.subr.bf16.mxu0 0
    %856 = vmatpush1.bf16.msra.mxu0 0
    %857 = vmatprep.subr.bf16.mxu0 0
    %858 = vmatpush1.bf16.msra.mxu0 0
    %859 = vmatprep.subr.bf16.mxu0 0
    %860 = vmatpush1.bf16.msra.mxu0 0
    %861 = vmatprep.subr.bf16.mxu0 0
    %862 = vmatpush1.bf16.msra.mxu0 0
    %863 = vmatprep.subr.bf16.mxu0 0
    %864 = vmatpush1.bf16.msra.mxu0 0
    %865 = vmatprep.subr.bf16.mxu0 0
    %866 = vmatpush1.bf16.msra.mxu0 0
    %867 = vmatprep.subr.bf16.mxu0 0
    %868 = vmatpush1.bf16.msra.mxu0 0
    %869 = vmatprep.subr.bf16.mxu0 0
    %870 = vmatpush1.bf16.msra.mxu0 0
    %871 = vmatprep.subr.bf16.mxu0 0
    %872 = vmatpush1.bf16.msra.mxu0 0
    %873 = vmatprep.subr.bf16.mxu0 0
    %874 = vmatpush1.bf16.msra.mxu0 0
    %875 = vmatprep.subr.bf16.mxu0 0
    %876 = vmatpush1.bf16.msra.mxu0 0
    %877 = vmatprep.mubr.bf16.mxu0 0
    %878 = vmatmul.mubr.bf16.gmra.mrb[0].mxu0 %v843
    %v879 = vpop.f32.mrb[0].mxu0
    %v880 = vadd.f32 %v841, %v879
    %v881 = vpop.f32.mrb[0].mxu0
    %v882 = vpop.f32.mrb[0].mxu0
    %v883 = vpop.f32.mrb[0].mxu0
    %884 = vdwg.mxu0
    %vm885 = vcmp.ge.f32.partialorder %v880, 0.0
    %v886 = vmul.f32 %v880, 0.01
    %v887 = vsel %vm885, %v880, %v886
    %v888 = vsel %vm56, %v887, 0.0
    %v889 = vrot.slane %v888, 4
    %v890 = vadd.f32 %v888, %v889
    %v891 = vrot.slane %v890, 2
    %v892 = vadd.f32 %v890, %v891
    %v893 = vrot.slane %v892, 1
    %v894 = vadd.f32 %v892, %v893
    %v895 = vmul.f32 %v894, %v110
    %v896 = vmul.f32 %v887, %v887
    %v897 = vsel %vm56, %v896, 0.0
    %v898 = vrot.slane %v897, 4
    %v899 = vadd.f32 %v897, %v898
    %v900 = vrot.slane %v899, 2
    %v901 = vadd.f32 %v899, %v900
    %v902 = vrot.slane %v901, 1
    %v903 = vadd.f32 %v901, %v902
    %v904 = vmul.f32 %v903, %v110
    %v905 = vmul.f32 %v895, %v895
    %v906 = vsub.f32 %v904, %v905
    %v907 = vmax.f32 %v906, 0.0
    %v908 = vadd.f32 %v907, 1e-05
    %v909 = vrsqrt.pop %v908
    %v910 = vmul.f32 %v836, %v909
    %v911 = vmul.f32 %v895, %v910
    %v913 = vrot.slane %v911, 7
    %v915 = vsub.f32 %v836, %v913
    %v916 = vlaneseq
    %v917 = vshrl.u32 %v916, 7
    %v918 = vsub.s32 1, %v917
    %v919 = vrot.slane %v910, %v918
    %v920 = vmul.f32 %v887, %v919
    %v921 = vlaneseq
    %v922 = vshrl.u32 %v921, 7
    %v923 = vsub.s32 2, %v922
    %v924 = vrot.slane %v915, %v923
    %v925 = vadd.f32 %v920, %v924
    %s926 = scalar_lea.vmem [#allocation2], 288
    %v927 = vld [vmem:[%s926] sm:$0xff]
    %v928 = vld [vmem:[%s926 + $0x8] sm:$0xff]
    %v929 = vld [vmem:[%s926 + $0x10] sm:$0xff]
    %v930 = vld [vmem:[%s926 + $0x18] sm:$0xff]
    %v931 = vpack.c.bf16 %v928, %v927
    %v932 = vpack.c.bf16 %v930, %v929
    %s933 = scalar_lea.vmem [#allocation4], 36
    %v934 = vld [vmem:[%s933] sm:$0xf]
    %v935 = vpack.c.bf16 %v925, %v925
    %v936 = vlaneseq
    %v937 = vshrl.u32 %v936, 7
    %v938 = vsub.s32 0, %v937
    %v939 = vrot.slane %v934, %v938
    %v941 = vsel %vm56, %v935, 0
    %943 = vmatprep.subr.bf16.mxu0 0
    %944 = vmatpush1.bf16.msra.mxu0 %v931
    %945 = vmatprep.subr.bf16.mxu0 0
    %946 = vmatpush1.bf16.msra.mxu0 %v932
    %947 = vmatprep.subr.bf16.mxu0 0
    %948 = vmatpush1.bf16.msra.mxu0 0
    %949 = vmatprep.subr.bf16.mxu0 0
    %950 = vmatpush1.bf16.msra.mxu0 0
    %951 = vmatprep.subr.bf16.mxu0 0
    %952 = vmatpush1.bf16.msra.mxu0 0
    %953 = vmatprep.subr.bf16.mxu0 0
    %954 = vmatpush1.bf16.msra.mxu0 0
    %955 = vmatprep.subr.bf16.mxu0 0
    %956 = vmatpush1.bf16.msra.mxu0 0
    %957 = vmatprep.subr.bf16.mxu0 0
    %958 = vmatpush1.bf16.msra.mxu0 0
    %959 = vmatprep.subr.bf16.mxu0 0
    %960 = vmatpush1.bf16.msra.mxu0 0
    %961 = vmatprep.subr.bf16.mxu0 0
    %962 = vmatpush1.bf16.msra.mxu0 0
    %963 = vmatprep.subr.bf16.mxu0 0
    %964 = vmatpush1.bf16.msra.mxu0 0
    %965 = vmatprep.subr.bf16.mxu0 0
    %966 = vmatpush1.bf16.msra.mxu0 0
    %967 = vmatprep.subr.bf16.mxu0 0
    %968 = vmatpush1.bf16.msra.mxu0 0
    %969 = vmatprep.subr.bf16.mxu0 0
    %970 = vmatpush1.bf16.msra.mxu0 0
    %971 = vmatprep.subr.bf16.mxu0 0
    %972 = vmatpush1.bf16.msra.mxu0 0
    %973 = vmatprep.subr.bf16.mxu0 0
    %974 = vmatpush1.bf16.msra.mxu0 0
    %975 = vmatprep.mubr.bf16.mxu0 0
    %976 = vmatmul.mubr.bf16.gmra.mrb[0].mxu0 %v941
    %v977 = vpop.f32.mrb[0].mxu0
    %v978 = vadd.f32 %v939, %v977
    %v979 = vpop.f32.mrb[0].mxu0
    %v980 = vpop.f32.mrb[0].mxu0
    %v981 = vpop.f32.mrb[0].mxu0
    %982 = vdwg.mxu0
    %vm983 = vcmp.ge.f32.partialorder %v978, 0.0
    %v984 = vmul.f32 %v978, 0.01
    %v985 = vsel %vm983, %v978, %v984
    %v986 = vsel %vm56, %v985, 0.0
    %v987 = vrot.slane %v986, 4
    %v988 = vadd.f32 %v986, %v987
    %v989 = vrot.slane %v988, 2
    %v990 = vadd.f32 %v988, %v989
    %v991 = vrot.slane %v990, 1
    %v992 = vadd.f32 %v990, %v991
    %v993 = vmul.f32 %v992, %v110
    %v994 = vmul.f32 %v985, %v985
    %v995 = vsel %vm56, %v994, 0.0
    %v996 = vrot.slane %v995, 4
    %v997 = vadd.f32 %v995, %v996
    %v998 = vrot.slane %v997, 2
    %v999 = vadd.f32 %v997, %v998
    %v1000 = vrot.slane %v999, 1
    %v1001 = vadd.f32 %v999, %v1000
    %v1002 = vmul.f32 %v1001, %v110
    %v1003 = vmul.f32 %v993, %v993
    %v1004 = vsub.f32 %v1002, %v1003
    %v1005 = vmax.f32 %v1004, 0.0
    %v1006 = vadd.f32 %v1005, 1e-05
    %v1007 = vrsqrt.pop %v1006
    %v1008 = vmul.f32 %v934, %v1007
    %v1009 = vmul.f32 %v993, %v1008
    %v1011 = vrot.slane %v1009, 7
    %v1013 = vsub.f32 %v934, %v1011
    %v1014 = vlaneseq
    %v1015 = vshrl.u32 %v1014, 7
    %v1016 = vsub.s32 1, %v1015
    %v1017 = vrot.slane %v1008, %v1016
    %v1018 = vmul.f32 %v985, %v1017
    %v1019 = vlaneseq
    %v1020 = vshrl.u32 %v1019, 7
    %v1021 = vsub.s32 2, %v1020
    %v1022 = vrot.slane %v1013, %v1021
    %v1023 = vadd.f32 %v1018, %v1022
    %s1024 = scalar_lea.vmem [#allocation2], 320
    %v1025 = vld [vmem:[%s1024] sm:$0xff]
    %v1026 = vld [vmem:[%s1024 + $0x8] sm:$0xff]
    %v1027 = vld [vmem:[%s1024 + $0x10] sm:$0xff]
    %v1028 = vld [vmem:[%s1024 + $0x18] sm:$0xff]
    %v1029 = vpack.c.bf16 %v1026, %v1025
    %v1030 = vpack.c.bf16 %v1028, %v1027
    %s1031 = scalar_lea.vmem [#allocation4], 40
    %v1032 = vld [vmem:[%s1031] sm:$0xf]
    %v1033 = vpack.c.bf16 %v1023, %v1023
    %v1034 = vlaneseq
    %v1035 = vshrl.u32 %v1034, 7
    %v1036 = vsub.s32 0, %v1035
    %v1037 = vrot.slane %v1032, %v1036
    %v1039 = vsel %vm56, %v1033, 0
    %1041 = vmatprep.subr.bf16.mxu0 0
    %1042 = vmatpush1.bf16.msra.mxu0 %v1029
    %1043 = vmatprep.subr.bf16.mxu0 0
    %1044 = vmatpush1.bf16.msra.mxu0 %v1030
    %1045 = vmatprep.subr.bf16.mxu0 0
    %1046 = vmatpush1.bf16.msra.mxu0 0
    %1047 = vmatprep.subr.bf16.mxu0 0
    %1048 = vmatpush1.bf16.msra.mxu0 0
    %1049 = vmatprep.subr.bf16.mxu0 0
    %1050 = vmatpush1.bf16.msra.mxu0 0
    %1051 = vmatprep.subr.bf16.mxu0 0
    %1052 = vmatpush1.bf16.msra.mxu0 0
    %1053 = vmatprep.subr.bf16.mxu0 0
    %1054 = vmatpush1.bf16.msra.mxu0 0
    %1055 = vmatprep.subr.bf16.mxu0 0
    %1056 = vmatpush1.bf16.msra.mxu0 0
    %1057 = vmatprep.subr.bf16.mxu0 0
    %1058 = vmatpush1.bf16.msra.mxu0 0
    %1059 = vmatprep.subr.bf16.mxu0 0
    %1060 = vmatpush1.bf16.msra.mxu0 0
    %1061 = vmatprep.subr.bf16.mxu0 0
    %1062 = vmatpush1.bf16.msra.mxu0 0
    %1063 = vmatprep.subr.bf16.mxu0 0
    %1064 = vmatpush1.bf16.msra.mxu0 0
    %1065 = vmatprep.subr.bf16.mxu0 0
    %1066 = vmatpush1.bf16.msra.mxu0 0
    %1067 = vmatprep.subr.bf16.mxu0 0
    %1068 = vmatpush1.bf16.msra.mxu0 0
    %1069 = vmatprep.subr.bf16.mxu0 0
    %1070 = vmatpush1.bf16.msra.mxu0 0
    %1071 = vmatprep.subr.bf16.mxu0 0
    %1072 = vmatpush1.bf16.msra.mxu0 0
    %1073 = vmatprep.mubr.bf16.mxu0 0
    %1074 = vmatmul.mubr.bf16.gmra.mrb[0].mxu0 %v1039
    %v1075 = vpop.f32.mrb[0].mxu0
    %v1076 = vadd.f32 %v1037, %v1075
    %v1077 = vpop.f32.mrb[0].mxu0
    %v1078 = vpop.f32.mrb[0].mxu0
    %v1079 = vpop.f32.mrb[0].mxu0
    %1080 = vdwg.mxu0
    %vm1081 = vcmp.ge.f32.partialorder %v1076, 0.0
    %v1082 = vmul.f32 %v1076, 0.01
    %v1083 = vsel %vm1081, %v1076, %v1082
    %v1084 = vsel %vm56, %v1083, 0.0
    %v1085 = vrot.slane %v1084, 4
    %v1086 = vadd.f32 %v1084, %v1085
    %v1087 = vrot.slane %v1086, 2
    %v1088 = vadd.f32 %v1086, %v1087
    %v1089 = vrot.slane %v1088, 1
    %v1090 = vadd.f32 %v1088, %v1089
    %v1091 = vmul.f32 %v1090, %v110
    %v1092 = vmul.f32 %v1083, %v1083
    %v1093 = vsel %vm56, %v1092, 0.0
    %v1094 = vrot.slane %v1093, 4
    %v1095 = vadd.f32 %v1093, %v1094
    %v1096 = vrot.slane %v1095, 2
    %v1097 = vadd.f32 %v1095, %v1096
    %v1098 = vrot.slane %v1097, 1
    %v1099 = vadd.f32 %v1097, %v1098
    %v1100 = vmul.f32 %v1099, %v110
    %v1101 = vmul.f32 %v1091, %v1091
    %v1102 = vsub.f32 %v1100, %v1101
    %v1103 = vmax.f32 %v1102, 0.0
    %v1104 = vadd.f32 %v1103, 1e-05
    %v1105 = vrsqrt.pop %v1104
    %v1106 = vmul.f32 %v1032, %v1105
    %v1107 = vmul.f32 %v1091, %v1106
    %v1109 = vrot.slane %v1107, 7
    %v1111 = vsub.f32 %v1032, %v1109
    %v1112 = vlaneseq
    %v1113 = vshrl.u32 %v1112, 7
    %v1114 = vsub.s32 1, %v1113
    %v1115 = vrot.slane %v1106, %v1114
    %v1116 = vmul.f32 %v1083, %v1115
    %v1117 = vlaneseq
    %v1118 = vshrl.u32 %v1117, 7
    %v1119 = vsub.s32 2, %v1118
    %v1120 = vrot.slane %v1111, %v1119
    %v1121 = vadd.f32 %v1116, %v1120
    %s1122 = scalar_lea.vmem [#allocation2], 352
    %v1123 = vld [vmem:[%s1122] sm:$0xff]
    %v1124 = vld [vmem:[%s1122 + $0x8] sm:$0xff]
    %v1125 = vld [vmem:[%s1122 + $0x10] sm:$0xff]
    %v1126 = vld [vmem:[%s1122 + $0x18] sm:$0xff]
    %v1127 = vpack.c.bf16 %v1124, %v1123
    %v1128 = vpack.c.bf16 %v1126, %v1125
    %s1129 = scalar_lea.vmem [#allocation4], 44
    %v1130 = vld [vmem:[%s1129] sm:$0xf]
    %v1131 = vpack.c.bf16 %v1121, %v1121
    %v1132 = vlaneseq
    %v1133 = vshrl.u32 %v1132, 7
    %v1134 = vsub.s32 0, %v1133
    %v1135 = vrot.slane %v1130, %v1134
    %v1137 = vsel %vm56, %v1131, 0
    %1139 = vmatprep.subr.bf16.mxu0 0
    %1140 = vmatpush1.bf16.msra.mxu0 %v1127
    %1141 = vmatprep.subr.bf16.mxu0 0
    %1142 = vmatpush1.bf16.msra.mxu0 %v1128
    %1143 = vmatprep.subr.bf16.mxu0 0
    %1144 = vmatpush1.bf16.msra.mxu0 0
    %1145 = vmatprep.subr.bf16.mxu0 0
    %1146 = vmatpush1.bf16.msra.mxu0 0
    %1147 = vmatprep.subr.bf16.mxu0 0
    %1148 = vmatpush1.bf16.msra.mxu0 0
    %1149 = vmatprep.subr.bf16.mxu0 0
    %1150 = vmatpush1.bf16.msra.mxu0 0
    %1151 = vmatprep.subr.bf16.mxu0 0
    %1152 = vmatpush1.bf16.msra.mxu0 0
    %1153 = vmatprep.subr.bf16.mxu0 0
    %1154 = vmatpush1.bf16.msra.mxu0 0
    %1155 = vmatprep.subr.bf16.mxu0 0
    %1156 = vmatpush1.bf16.msra.mxu0 0
    %1157 = vmatprep.subr.bf16.mxu0 0
    %1158 = vmatpush1.bf16.msra.mxu0 0
    %1159 = vmatprep.subr.bf16.mxu0 0
    %1160 = vmatpush1.bf16.msra.mxu0 0
    %1161 = vmatprep.subr.bf16.mxu0 0
    %1162 = vmatpush1.bf16.msra.mxu0 0
    %1163 = vmatprep.subr.bf16.mxu0 0
    %1164 = vmatpush1.bf16.msra.mxu0 0
    %1165 = vmatprep.subr.bf16.mxu0 0
    %1166 = vmatpush1.bf16.msra.mxu0 0
    %1167 = vmatprep.subr.bf16.mxu0 0
    %1168 = vmatpush1.bf16.msra.mxu0 0
    %1169 = vmatprep.subr.bf16.mxu0 0
    %1170 = vmatpush1.bf16.msra.mxu0 0
    %1171 = vmatprep.mubr.bf16.mxu0 0
    %1172 = vmatmul.mubr.bf16.gmra.mrb[0].mxu0 %v1137
    %v1173 = vpop.f32.mrb[0].mxu0
    %v1174 = vadd.f32 %v1135, %v1173
    %v1175 = vpop.f32.mrb[0].mxu0
    %v1176 = vpop.f32.mrb[0].mxu0
    %v1177 = vpop.f32.mrb[0].mxu0
    %1178 = vdwg.mxu0
    %vm1179 = vcmp.ge.f32.partialorder %v1174, 0.0
    %v1180 = vmul.f32 %v1174, 0.01
    %v1181 = vsel %vm1179, %v1174, %v1180
    %v1182 = vsel %vm56, %v1181, 0.0
    %v1183 = vrot.slane %v1182, 4
    %v1184 = vadd.f32 %v1182, %v1183
    %v1185 = vrot.slane %v1184, 2
    %v1186 = vadd.f32 %v1184, %v1185
    %v1187 = vrot.slane %v1186, 1
    %v1188 = vadd.f32 %v1186, %v1187
    %v1189 = vmul.f32 %v1188, %v110
    %v1190 = vmul.f32 %v1181, %v1181
    %v1191 = vsel %vm56, %v1190, 0.0
    %v1192 = vrot.slane %v1191, 4
    %v1193 = vadd.f32 %v1191, %v1192
    %v1194 = vrot.slane %v1193, 2
    %v1195 = vadd.f32 %v1193, %v1194
    %v1196 = vrot.slane %v1195, 1
    %v1197 = vadd.f32 %v1195, %v1196
    %v1198 = vmul.f32 %v1197, %v110
    %v1199 = vmul.f32 %v1189, %v1189
    %v1200 = vsub.f32 %v1198, %v1199
    %v1201 = vmax.f32 %v1200, 0.0
    %v1202 = vadd.f32 %v1201, 1e-05
    %v1203 = vrsqrt.pop %v1202
    %v1204 = vmul.f32 %v1130, %v1203
    %v1205 = vmul.f32 %v1189, %v1204
    %v1207 = vrot.slane %v1205, 7
    %v1209 = vsub.f32 %v1130, %v1207
    %v1210 = vlaneseq
    %v1211 = vshrl.u32 %v1210, 7
    %v1212 = vsub.s32 1, %v1211
    %v1213 = vrot.slane %v1204, %v1212
    %v1214 = vmul.f32 %v1181, %v1213
    %v1215 = vlaneseq
    %v1216 = vshrl.u32 %v1215, 7
    %v1217 = vsub.s32 2, %v1216
    %v1218 = vrot.slane %v1209, %v1217
    %v1219 = vadd.f32 %v1214, %v1218
    %s1220 = scalar_lea.vmem [#allocation2], 384
    %v1221 = vld [vmem:[%s1220] sm:$0xff]
    %v1222 = vld [vmem:[%s1220 + $0x8] sm:$0xff]
    %v1223 = vld [vmem:[%s1220 + $0x10] sm:$0xff]
    %v1224 = vld [vmem:[%s1220 + $0x18] sm:$0xff]
    %v1225 = vpack.c.bf16 %v1222, %v1221
    %v1226 = vpack.c.bf16 %v1224, %v1223
    %s1227 = scalar_lea.vmem [#allocation4], 48
    %v1228 = vld [vmem:[%s1227] sm:$0xf]
    %v1229 = vpack.c.bf16 %v1219, %v1219
    %v1230 = vlaneseq
    %v1231 = vshrl.u32 %v1230, 7
    %v1232 = vsub.s32 0, %v1231
    %v1233 = vrot.slane %v1228, %v1232
    %v1235 = vsel %vm56, %v1229, 0
    %1237 = vmatprep.subr.bf16.mxu0 0
    %1238 = vmatpush1.bf16.msra.mxu0 %v1225
    %1239 = vmatprep.subr.bf16.mxu0 0
    %1240 = vmatpush1.bf16.msra.mxu0 %v1226
    %1241 = vmatprep.subr.bf16.mxu0 0
    %1242 = vmatpush1.bf16.msra.mxu0 0
    %1243 = vmatprep.subr.bf16.mxu0 0
    %1244 = vmatpush1.bf16.msra.mxu0 0
    %1245 = vmatprep.subr.bf16.mxu0 0
    %1246 = vmatpush1.bf16.msra.mxu0 0
    %1247 = vmatprep.subr.bf16.mxu0 0
    %1248 = vmatpush1.bf16.msra.mxu0 0
    %1249 = vmatprep.subr.bf16.mxu0 0
    %1250 = vmatpush1.bf16.msra.mxu0 0
    %1251 = vmatprep.subr.bf16.mxu0 0
    %1252 = vmatpush1.bf16.msra.mxu0 0
    %1253 = vmatprep.subr.bf16.mxu0 0
    %1254 = vmatpush1.bf16.msra.mxu0 0
    %1255 = vmatprep.subr.bf16.mxu0 0
    %1256 = vmatpush1.bf16.msra.mxu0 0
    %1257 = vmatprep.subr.bf16.mxu0 0
    %1258 = vmatpush1.bf16.msra.mxu0 0
    %1259 = vmatprep.subr.bf16.mxu0 0
    %1260 = vmatpush1.bf16.msra.mxu0 0
    %1261 = vmatprep.subr.bf16.mxu0 0
    %1262 = vmatpush1.bf16.msra.mxu0 0
    %1263 = vmatprep.subr.bf16.mxu0 0
    %1264 = vmatpush1.bf16.msra.mxu0 0
    %1265 = vmatprep.subr.bf16.mxu0 0
    %1266 = vmatpush1.bf16.msra.mxu0 0
    %1267 = vmatprep.subr.bf16.mxu0 0
    %1268 = vmatpush1.bf16.msra.mxu0 0
    %1269 = vmatprep.mubr.bf16.mxu0 0
    %1270 = vmatmul.mubr.bf16.gmra.mrb[0].mxu0 %v1235
    %v1271 = vpop.f32.mrb[0].mxu0
    %v1272 = vadd.f32 %v1233, %v1271
    %v1273 = vpop.f32.mrb[0].mxu0
    %v1274 = vpop.f32.mrb[0].mxu0
    %v1275 = vpop.f32.mrb[0].mxu0
    %1276 = vdwg.mxu0
    %vm1277 = vcmp.ge.f32.partialorder %v1272, 0.0
    %v1278 = vmul.f32 %v1272, 0.01
    %v1279 = vsel %vm1277, %v1272, %v1278
    %v1280 = vsel %vm56, %v1279, 0.0
    %v1281 = vrot.slane %v1280, 4
    %v1282 = vadd.f32 %v1280, %v1281
    %v1283 = vrot.slane %v1282, 2
    %v1284 = vadd.f32 %v1282, %v1283
    %v1285 = vrot.slane %v1284, 1
    %v1286 = vadd.f32 %v1284, %v1285
    %v1287 = vmul.f32 %v1286, %v110
    %v1288 = vmul.f32 %v1279, %v1279
    %v1289 = vsel %vm56, %v1288, 0.0
    %v1290 = vrot.slane %v1289, 4
    %v1291 = vadd.f32 %v1289, %v1290
    %v1292 = vrot.slane %v1291, 2
    %v1293 = vadd.f32 %v1291, %v1292
    %v1294 = vrot.slane %v1293, 1
    %v1295 = vadd.f32 %v1293, %v1294
    %v1296 = vmul.f32 %v1295, %v110
    %v1297 = vmul.f32 %v1287, %v1287
    %v1298 = vsub.f32 %v1296, %v1297
    %v1299 = vmax.f32 %v1298, 0.0
    %v1300 = vadd.f32 %v1299, 1e-05
    %v1301 = vrsqrt.pop %v1300
    %v1302 = vmul.f32 %v1228, %v1301
    %v1303 = vmul.f32 %v1287, %v1302
    %v1305 = vrot.slane %v1303, 7
    %v1307 = vsub.f32 %v1228, %v1305
    %v1308 = vlaneseq
    %v1309 = vshrl.u32 %v1308, 7
    %v1310 = vsub.s32 1, %v1309
    %v1311 = vrot.slane %v1302, %v1310
    %v1312 = vmul.f32 %v1279, %v1311
    %v1313 = vlaneseq
    %v1314 = vshrl.u32 %v1313, 7
    %v1315 = vsub.s32 2, %v1314
    %v1316 = vrot.slane %v1307, %v1315
    %v1317 = vadd.f32 %v1312, %v1316
    %s1318 = scalar_lea.vmem [#allocation2], 416
    %v1319 = vld [vmem:[%s1318] sm:$0xff]
    %v1320 = vld [vmem:[%s1318 + $0x8] sm:$0xff]
    %v1321 = vld [vmem:[%s1318 + $0x10] sm:$0xff]
    %v1322 = vld [vmem:[%s1318 + $0x18] sm:$0xff]
    %v1323 = vpack.c.bf16 %v1320, %v1319
    %v1324 = vpack.c.bf16 %v1322, %v1321
    %s1325 = scalar_lea.vmem [#allocation4], 52
    %v1326 = vld [vmem:[%s1325] sm:$0xf]
    %v1327 = vpack.c.bf16 %v1317, %v1317
    %v1328 = vlaneseq
    %v1329 = vshrl.u32 %v1328, 7
    %v1330 = vsub.s32 0, %v1329
    %v1331 = vrot.slane %v1326, %v1330
    %v1333 = vsel %vm56, %v1327, 0
    %1335 = vmatprep.subr.bf16.mxu0 0
    %1336 = vmatpush1.bf16.msra.mxu0 %v1323
    %1337 = vmatprep.subr.bf16.mxu0 0
    %1338 = vmatpush1.bf16.msra.mxu0 %v1324
    %1339 = vmatprep.subr.bf16.mxu0 0
    %1340 = vmatpush1.bf16.msra.mxu0 0
    %1341 = vmatprep.subr.bf16.mxu0 0
    %1342 = vmatpush1.bf16.msra.mxu0 0
    %1343 = vmatprep.subr.bf16.mxu0 0
    %1344 = vmatpush1.bf16.msra.mxu0 0
    %1345 = vmatprep.subr.bf16.mxu0 0
    %1346 = vmatpush1.bf16.msra.mxu0 0
    %1347 = vmatprep.subr.bf16.mxu0 0
    %1348 = vmatpush1.bf16.msra.mxu0 0
    %1349 = vmatprep.subr.bf16.mxu0 0
    %1350 = vmatpush1.bf16.msra.mxu0 0
    %1351 = vmatprep.subr.bf16.mxu0 0
    %1352 = vmatpush1.bf16.msra.mxu0 0
    %1353 = vmatprep.subr.bf16.mxu0 0
    %1354 = vmatpush1.bf16.msra.mxu0 0
    %1355 = vmatprep.subr.bf16.mxu0 0
    %1356 = vmatpush1.bf16.msra.mxu0 0
    %1357 = vmatprep.subr.bf16.mxu0 0
    %1358 = vmatpush1.bf16.msra.mxu0 0
    %1359 = vmatprep.subr.bf16.mxu0 0
    %1360 = vmatpush1.bf16.msra.mxu0 0
    %1361 = vmatprep.subr.bf16.mxu0 0
    %1362 = vmatpush1.bf16.msra.mxu0 0
    %1363 = vmatprep.subr.bf16.mxu0 0
    %1364 = vmatpush1.bf16.msra.mxu0 0
    %1365 = vmatprep.subr.bf16.mxu0 0
    %1366 = vmatpush1.bf16.msra.mxu0 0
    %1367 = vmatprep.mubr.bf16.mxu0 0
    %1368 = vmatmul.mubr.bf16.gmra.mrb[0].mxu0 %v1333
    %v1369 = vpop.f32.mrb[0].mxu0
    %v1370 = vadd.f32 %v1331, %v1369
    %v1371 = vpop.f32.mrb[0].mxu0
    %v1372 = vpop.f32.mrb[0].mxu0
    %v1373 = vpop.f32.mrb[0].mxu0
    %1374 = vdwg.mxu0
    %vm1375 = vcmp.ge.f32.partialorder %v1370, 0.0
    %v1376 = vmul.f32 %v1370, 0.01
    %v1377 = vsel %vm1375, %v1370, %v1376
    %v1378 = vsel %vm56, %v1377, 0.0
    %v1379 = vrot.slane %v1378, 4
    %v1380 = vadd.f32 %v1378, %v1379
    %v1381 = vrot.slane %v1380, 2
    %v1382 = vadd.f32 %v1380, %v1381
    %v1383 = vrot.slane %v1382, 1
    %v1384 = vadd.f32 %v1382, %v1383
    %v1385 = vmul.f32 %v1384, %v110
    %v1386 = vmul.f32 %v1377, %v1377
    %v1387 = vsel %vm56, %v1386, 0.0
    %v1388 = vrot.slane %v1387, 4
    %v1389 = vadd.f32 %v1387, %v1388
    %v1390 = vrot.slane %v1389, 2
    %v1391 = vadd.f32 %v1389, %v1390
    %v1392 = vrot.slane %v1391, 1
    %v1393 = vadd.f32 %v1391, %v1392
    %v1394 = vmul.f32 %v1393, %v110
    %v1395 = vmul.f32 %v1385, %v1385
    %v1396 = vsub.f32 %v1394, %v1395
    %v1397 = vmax.f32 %v1396, 0.0
    %v1398 = vadd.f32 %v1397, 1e-05
    %v1399 = vrsqrt.pop %v1398
    %v1400 = vmul.f32 %v1326, %v1399
    %v1401 = vmul.f32 %v1385, %v1400
    %v1403 = vrot.slane %v1401, 7
    %v1405 = vsub.f32 %v1326, %v1403
    %v1406 = vlaneseq
    %v1407 = vshrl.u32 %v1406, 7
    %v1408 = vsub.s32 1, %v1407
    %v1409 = vrot.slane %v1400, %v1408
    %v1410 = vmul.f32 %v1377, %v1409
    %v1411 = vlaneseq
    %v1412 = vshrl.u32 %v1411, 7
    %v1413 = vsub.s32 2, %v1412
    %v1414 = vrot.slane %v1405, %v1413
    %v1415 = vadd.f32 %v1410, %v1414
    %s1416 = scalar_lea.vmem [#allocation2], 448
    %v1417 = vld [vmem:[%s1416] sm:$0xff]
    %v1418 = vld [vmem:[%s1416 + $0x8] sm:$0xff]
    %v1419 = vld [vmem:[%s1416 + $0x10] sm:$0xff]
    %v1420 = vld [vmem:[%s1416 + $0x18] sm:$0xff]
    %v1421 = vpack.c.bf16 %v1418, %v1417
    %v1422 = vpack.c.bf16 %v1420, %v1419
    %s1423 = scalar_lea.vmem [#allocation4], 56
    %v1424 = vld [vmem:[%s1423] sm:$0xf]
    %v1425 = vpack.c.bf16 %v1415, %v1415
    %v1426 = vlaneseq
    %v1427 = vshrl.u32 %v1426, 7
    %v1428 = vsub.s32 0, %v1427
    %v1429 = vrot.slane %v1424, %v1428
    %v1431 = vsel %vm56, %v1425, 0
    %1433 = vmatprep.subr.bf16.mxu0 0
    %1434 = vmatpush1.bf16.msra.mxu0 %v1421
    %1435 = vmatprep.subr.bf16.mxu0 0
    %1436 = vmatpush1.bf16.msra.mxu0 %v1422
    %1437 = vmatprep.subr.bf16.mxu0 0
    %1438 = vmatpush1.bf16.msra.mxu0 0
    %1439 = vmatprep.subr.bf16.mxu0 0
    %1440 = vmatpush1.bf16.msra.mxu0 0
    %1441 = vmatprep.subr.bf16.mxu0 0
    %1442 = vmatpush1.bf16.msra.mxu0 0
    %1443 = vmatprep.subr.bf16.mxu0 0
    %1444 = vmatpush1.bf16.msra.mxu0 0
    %1445 = vmatprep.subr.bf16.mxu0 0
    %1446 = vmatpush1.bf16.msra.mxu0 0
    %1447 = vmatprep.subr.bf16.mxu0 0
    %1448 = vmatpush1.bf16.msra.mxu0 0
    %1449 = vmatprep.subr.bf16.mxu0 0
    %1450 = vmatpush1.bf16.msra.mxu0 0
    %1451 = vmatprep.subr.bf16.mxu0 0
    %1452 = vmatpush1.bf16.msra.mxu0 0
    %1453 = vmatprep.subr.bf16.mxu0 0
    %1454 = vmatpush1.bf16.msra.mxu0 0
    %1455 = vmatprep.subr.bf16.mxu0 0
    %1456 = vmatpush1.bf16.msra.mxu0 0
    %1457 = vmatprep.subr.bf16.mxu0 0
    %1458 = vmatpush1.bf16.msra.mxu0 0
    %1459 = vmatprep.subr.bf16.mxu0 0
    %1460 = vmatpush1.bf16.msra.mxu0 0
    %1461 = vmatprep.subr.bf16.mxu0 0
    %1462 = vmatpush1.bf16.msra.mxu0 0
    %1463 = vmatprep.subr.bf16.mxu0 0
    %1464 = vmatpush1.bf16.msra.mxu0 0
    %1465 = vmatprep.mubr.bf16.mxu0 0
    %1466 = vmatmul.mubr.bf16.gmra.mrb[0].mxu0 %v1431
    %v1467 = vpop.f32.mrb[0].mxu0
    %v1468 = vadd.f32 %v1429, %v1467
    %v1469 = vpop.f32.mrb[0].mxu0
    %v1470 = vpop.f32.mrb[0].mxu0
    %v1471 = vpop.f32.mrb[0].mxu0
    %1472 = vdwg.mxu0
    %vm1473 = vcmp.ge.f32.partialorder %v1468, 0.0
    %v1474 = vmul.f32 %v1468, 0.01
    %v1475 = vsel %vm1473, %v1468, %v1474
    %v1476 = vsel %vm56, %v1475, 0.0
    %v1477 = vrot.slane %v1476, 4
    %v1478 = vadd.f32 %v1476, %v1477
    %v1479 = vrot.slane %v1478, 2
    %v1480 = vadd.f32 %v1478, %v1479
    %v1481 = vrot.slane %v1480, 1
    %v1482 = vadd.f32 %v1480, %v1481
    %v1483 = vmul.f32 %v1482, %v110
    %v1484 = vmul.f32 %v1475, %v1475
    %v1485 = vsel %vm56, %v1484, 0.0
    %v1486 = vrot.slane %v1485, 4
    %v1487 = vadd.f32 %v1485, %v1486
    %v1488 = vrot.slane %v1487, 2
    %v1489 = vadd.f32 %v1487, %v1488
    %v1490 = vrot.slane %v1489, 1
    %v1491 = vadd.f32 %v1489, %v1490
    %v1492 = vmul.f32 %v1491, %v110
    %v1493 = vmul.f32 %v1483, %v1483
    %v1494 = vsub.f32 %v1492, %v1493
    %v1495 = vmax.f32 %v1494, 0.0
    %v1496 = vadd.f32 %v1495, 1e-05
    %v1497 = vrsqrt.pop %v1496
    %v1498 = vmul.f32 %v1424, %v1497
    %v1499 = vmul.f32 %v1483, %v1498
    %v1501 = vrot.slane %v1499, 7
    %v1503 = vsub.f32 %v1424, %v1501
    %v1504 = vlaneseq
    %v1505 = vshrl.u32 %v1504, 7
    %v1506 = vsub.s32 1, %v1505
    %v1507 = vrot.slane %v1498, %v1506
    %v1508 = vmul.f32 %v1475, %v1507
    %v1509 = vlaneseq
    %v1510 = vshrl.u32 %v1509, 7
    %v1511 = vsub.s32 2, %v1510
    %v1512 = vrot.slane %v1503, %v1511
    %v1513 = vadd.f32 %v1508, %v1512
    %s1514 = scalar_lea.vmem [#allocation4], 60
    %v1515 = vld [vmem:[%s1514] sm:$0xf]
    %v1516 = vlaneseq
    %v1517 = vshrl.u32 %v1516, 7
    %v1518 = vsub.s32 0, %v1517
    %v1519 = vrot.slane %v1515, %v1518
    %v1520 = vmul.f32 %v1513, %v1519
    %v1521 = vsel %vm56, %v1520, 0.0
    %1522 = vadd.xlane.f32.xlu0 %v1521
    %v1523 = vpop.xlane.xlu0 %1522
    %v1524 = vlaneseq
    %v1525 = vshrl.u32 %v1524, 7
    %v1526 = vsub.s32 1, %v1525
    %v1527 = vrot.slane %v1515, %v1526
    %v1528 = vadd.f32 %v1523, %v1527
    %vm1529 = vcmask 7168
    %1530 = vst.msk [vmem:[%s3] sm:$0xff] %vm1529, %v1528
    // Predicated region
    $region22: #{mlp_forward.1} parent=1 // pred_check
      _
    $region23: #{mlp_forward.1} parent=1 // pred_check_branch
      %1532 = sbr.rel (0) target = $region25
    $region24: #{mlp_forward.1} parent=1 // pred_region
      _
    $region25: #{mlp_forward.1} parent=1 // pred_fallthru
      _
    // Predicated region
    $region26: #{mlp_forward.1} parent=1 // pred_check
      _
    $region27: #{mlp_forward.1} parent=1 // pred_check_branch
      %1534 = sbr.rel (0) target = $region29
    $region28: #{mlp_forward.1} parent=1 // pred_region
      _
    $region29: #{mlp_forward.1} parent=1 // pred_fallthru
      _
    %1535 = vsyncpa [#allocation3], 1
    %1536 = vsyncpa [#allocation5], 1

</llo_original>
